<compile_context>
chip_gen: v7x
topology: tpu7x:2x2x1
jax: 0.10.0
libtpu: 0.0.40
codegen_flags: <defaults>
</compile_context>

<pallas_src>
import functools

import jax
import jax.numpy as jnp
from jax.experimental import pallas as pl
from jax.experimental.pallas import tpu as pltpu

INPUT_DIM = 7
INPUT_PAD = 8            # K padded 7 -> 8; the extra column carries the constant 1 for b1
HIDDEN_DIMS = [128, 128, 64]
H3_PAD = 128             # hidden-3 padded 64 -> 128 so W2/W3 share one (256,128) slab
OUTPUT_DIM = 4
BN_EPS = 1e-5


def _mlp_kernel(x_ref, w1_ref, w23_ref, b23_ref, w4_ref, b4_ref, o_ref):
    # Block 1: Linear(7->128) + ReLU, all f32.  b1 is folded into row 7 of W1
    # (x's pad column is 1.0), so this is a pure matmul.
    h = jnp.dot(x_ref[...], w1_ref[...], preferred_element_type=jnp.float32)
    h = jnp.maximum(h, 0.0)

    # Block 2: Linear(128->128) + ReLU (BN1 affine pre-folded into W2/b2).
    # bf16 MXU operands, f32 accumulation; bias add / ReLU in f32.
    h = jnp.dot(h.astype(jnp.bfloat16), w23_ref[0:128, :],
                preferred_element_type=jnp.float32) + b23_ref[0:1, :]
    h = jnp.maximum(h, 0.0)

    # Block 3: Linear(128->64) + ReLU (BN2 folded into W3/b3), output lanes
    # zero-padded 64 -> 128 (padded columns stay exactly 0 through the ReLU).
    h = jnp.dot(h.astype(jnp.bfloat16), w23_ref[128:256, :],
                preferred_element_type=jnp.float32) + b23_ref[1:2, :]
    h = jnp.maximum(h, 0.0)

    # Output head: Linear(64->4) with BN3 folded in, kept f32 (tiny), 4-wide store.
    out = jnp.dot(h, w4_ref[...], preferred_element_type=jnp.float32) + b4_ref[...]
    o_ref[...] = out.astype(o_ref.dtype)


def _fold_and_pack_params(params):
    """Fold BN affines + b1 into the Linear weights, pad, pack into VMEM slabs."""
    (w1, b1, s1, t1,
     w2, b2, s2, t2,
     w3, b3, s3, t3,
     w4, b4) = params

    # (relu(.) * s + t) @ W + b  ==  relu(.) @ (s^T * W) + (t @ W + b)
    w2f = w2 * s1.reshape(-1, 1)
    b2f = b2 + t1 @ w2
    w3f = w3 * s2.reshape(-1, 1)
    b3f = b3 + t2 @ w3
    w4f = w4 * s3.reshape(-1, 1)
    b4f = b4 + t3 @ w4

    # Layer 1: pad K 7 -> 8 and fold b1 into the pad row (x pad column is 1.0).
    w1p = jnp.zeros((INPUT_PAD, w1.shape[1]), jnp.float32)
    w1p = w1p.at[:INPUT_DIM].set(w1).at[INPUT_DIM].set(b1[0])

    # W2 / W3 packed into one bf16 slab (W3 lane-padded 64 -> 128 with zeros).
    w3p = jnp.zeros((w3f.shape[0], H3_PAD), jnp.float32).at[:, :w3f.shape[1]].set(w3f)
    w23 = jnp.concatenate([w2f, w3p], axis=0).astype(jnp.bfloat16)      # (256, 128)

    # b2 / b3 packed into one f32 slab (b3 lane-padded with zeros).
    b3p = jnp.zeros((1, H3_PAD), jnp.float32).at[:, :b3f.shape[1]].set(b3f)
    b23 = jnp.concatenate([b2f, b3p], axis=0)                           # (2, 128)

    # Head: pad K 64 -> 128 (padded rows multiply exact-zero activations); f32.
    w4p = jnp.zeros((H3_PAD, OUTPUT_DIM), jnp.float32).at[:w4f.shape[0]].set(w4f)

    return w1p, w23, b23, w4p, b4f


def aero_thermal_net_forward(x, params, *, batch_tile=512):
    """Full fused MLP in one pallas_call, tiled over the batch axis.

    For best v7x utilization pick batch_tile so that ceil(B/batch_tile) is an
    even number >= 2 (the "parallel" batch axis then splits across both TCs).
    """
    B, in_dim = x.shape
    assert in_dim == INPUT_DIM

    w1p, w23, b23, w4p, b4f = _fold_and_pack_params(params)

    bt = batch_tile
    Bp = ((B + bt - 1) // bt) * bt               # pad batch to a tile multiple
    xp = jnp.zeros((Bp, INPUT_PAD), jnp.float32)
    xp = xp.at[:B, :INPUT_DIM].set(x.astype(jnp.float32))
    xp = xp.at[:, INPUT_DIM].set(1.0)            # constant-1 column carries b1

    def const_spec(arr):
        # Whole (small) parameter stays VMEM-resident; constant index_map means
        # the pipeliner re-uses the same block every grid step (no re-DMA).
        return pl.BlockSpec(arr.shape, lambda i: (0, 0))

    x_spec = pl.BlockSpec((bt, INPUT_PAD), lambda i: (i, 0))
    o_spec = pl.BlockSpec((bt, OUTPUT_DIM), lambda i: (i, 0))

    out = pl.pallas_call(
        _mlp_kernel,
        out_shape=jax.ShapeDtypeStruct((Bp, OUTPUT_DIM), jnp.float32),
        grid_spec=pltpu.PrefetchScalarGridSpec(
            num_scalar_prefetch=0,
            grid=(Bp // bt,),
            in_specs=[x_spec,
                      const_spec(w1p), const_spec(w23), const_spec(b23),
                      const_spec(w4p), const_spec(b4f)],
            out_specs=o_spec,
        ),
        compiler_params=pltpu.CompilerParams(
            dimension_semantics=("parallel",)),   # batch tiles shard across v7x TCs
    )(xp, w1p, w23, b23, w4p, b4f)

    return out[:B]


def init_params(key):
    """Deterministic synthetic parameters matching the PyTorch module shapes.

    Linear weights are stored as (in, out) (PyTorch weight.T). BatchNorm1d
    (gamma, beta, running_mean, running_var) is pre-folded into
    scale = gamma / sqrt(running_var + eps), shift = beta - running_mean * scale,
    kept as (1, F) vectors (the wrapper later folds them into the next Linear).
    """
    dims = [INPUT_DIM] + HIDDEN_DIMS + [OUTPUT_DIM]
    keys = jax.random.split(key, 32)
    ki = iter(range(32))
    params = []
    for li in range(3):  # three Linear+ReLU+BN(+Dropout) blocks
        din, dout = dims[li], dims[li + 1]
        w = jax.random.normal(keys[next(ki)], (din, dout), jnp.float32) * 0.1
        b = jax.random.normal(keys[next(ki)], (1, dout), jnp.float32) * 0.05
        gamma = 1.0 + 0.1 * jax.random.normal(keys[next(ki)], (1, dout), jnp.float32)
        beta = 0.05 * jax.random.normal(keys[next(ki)], (1, dout), jnp.float32)
        r_mean = 0.1 * jax.random.normal(keys[next(ki)], (1, dout), jnp.float32)
        r_var = 1.0 + 0.1 * jax.random.uniform(keys[next(ki)], (1, dout), jnp.float32)
        scale = gamma / jnp.sqrt(r_var + BN_EPS)
        shift = beta - r_mean * scale
        params += [w, b, scale, shift]
    # output head
    din, dout = dims[3], dims[4]
    w4 = jax.random.normal(keys[next(ki)], (din, dout), jnp.float32) * 0.1
    b4 = jax.random.normal(keys[next(ki)], (1, dout), jnp.float32) * 0.05
    params += [w4, b4]
    return tuple(params)


def reference_forward(x, params):
    """Pure-JAX f32 reference of the same (eval-mode) forward pass, unfolded."""
    (w1, b1, s1, t1, w2, b2, s2, t2, w3, b3, s3, t3, w4, b4) = params
    h = jnp.maximum(x @ w1 + b1, 0.0) * s1 + t1
    h = jnp.maximum(h @ w2 + b2, 0.0) * s2 + t2
    h = jnp.maximum(h @ w3 + b3, 0.0) * s3 + t3
    return h @ w4 + b4


if __name__ == "__main__":
    key = jax.random.PRNGKey(0)
    k_param, k_x = jax.random.split(key)

    params = init_params(k_param)

    # Four 512-row tiles -> grid=(4,): even and >= 2, so v7x can split the
    # "parallel" batch axis across both TensorCores; M=512 per MXU call amortizes
    # the ~0.35 us per-grid-step overhead and per-layer MXU push/drain.
    B = 2048
    x = jax.random.normal(k_x, (B, INPUT_DIM), jnp.float32)

    fwd = jax.jit(functools.partial(aero_thermal_net_forward, batch_tile=512))
    out = jax.block_until_ready(fwd(x, params))

    ref = reference_forward(x, params)
    assert out.shape == (B, OUTPUT_DIM)
    # Layers 2/3 use bf16 MXU operands (f32 accumulation) -> loosened tolerance.
    err = float(jnp.max(jnp.abs(out - ref)))
    assert jnp.allclose(out, ref, atol=5e-2, rtol=5e-2), f"max abs err = {err}"

    print("KERNEL_OK")
</pallas_src>

<mosaic_0001>
module attributes {stable_mosaic.version = 11 : i64} {
  func.func @_mlp_kernel(%arg0: i32, %arg1: memref<512x8xf32, #tpu.memory_space<vmem>>, %arg2: memref<8x128xf32, #tpu.memory_space<vmem>>, %arg3: memref<256x128xbf16, #tpu.memory_space<vmem>>, %arg4: memref<2x128xf32, #tpu.memory_space<vmem>>, %arg5: memref<128x4xf32, #tpu.memory_space<vmem>>, %arg6: memref<1x4xf32, #tpu.memory_space<vmem>>, %arg7: memref<512x4xf32, #tpu.memory_space<vmem>>) attributes {dimension_semantics = [#tpu.dimension_semantics<parallel>], iteration_bounds = array<i64: 4>, scalar_prefetch = 0 : i64, scratch_operands = 0 : i64, tpu.core_type = #tpu.core_type<tc>, window_params = [{transform_indices = @transform_0, window_bounds = array<i64: 512, 8>}, {pipeline_mode = #tpu.pipeline_mode<synchronous>, transform_indices = @transform_1, window_bounds = array<i64: 8, 128>}, {pipeline_mode = #tpu.pipeline_mode<synchronous>, transform_indices = @transform_2, window_bounds = array<i64: 256, 128>}, {pipeline_mode = #tpu.pipeline_mode<synchronous>, transform_indices = @transform_3, window_bounds = array<i64: 2, 128>}, {pipeline_mode = #tpu.pipeline_mode<synchronous>, transform_indices = @transform_4, window_bounds = array<i64: 128, 4>}, {pipeline_mode = #tpu.pipeline_mode<synchronous>, transform_indices = @transform_5, window_bounds = array<i64: 1, 4>}, {transform_indices = @transform_6, window_bounds = array<i64: 512, 4>}]} {
    %c0 = arith.constant 0 : index
    %c0_0 = arith.constant 0 : index
    %0 = vector.load %arg1[%c0, %c0_0] : memref<512x8xf32, #tpu.memory_space<vmem>>, vector<512x8xf32>
    %c0_1 = arith.constant 0 : index
    %c0_2 = arith.constant 0 : index
    %1 = vector.load %arg2[%c0_1, %c0_2] : memref<8x128xf32, #tpu.memory_space<vmem>>, vector<8x128xf32>
    %cst = arith.constant dense<0.000000e+00> : vector<512x128xf32>
    %2 = tpu.matmul %0, %1, %cst {dimension_numbers = #tpu.dot_dimension_numbers<[1], [0], [0], [1], [0, 0, 1, 1], [], []>} : vector<512x8xf32>, vector<8x128xf32>, vector<512x128xf32> -> vector<512x128xf32>
    %cst_3 = arith.constant 0.000000e+00 : f32
    %3 = vector.broadcast %cst_3 : f32 to vector<512x128xf32>
    %4 = arith.maximumf %2, %3 : vector<512x128xf32>
    %5 = arith.truncf %4 : vector<512x128xf32> to vector<512x128xbf16>
    %c0_4 = arith.constant 0 : index
    %c0_5 = arith.constant 0 : index
    %6 = vector.load %arg3[%c0_4, %c0_5] : memref<256x128xbf16, #tpu.memory_space<vmem>>, vector<128x128xbf16>
    %cst_6 = arith.constant dense<0.000000e+00> : vector<512x128xf32>
    %7 = tpu.matmul %5, %6, %cst_6 {dimension_numbers = #tpu.dot_dimension_numbers<[1], [0], [0], [1], [0, 0, 1, 1], [], []>} : vector<512x128xbf16>, vector<128x128xbf16>, vector<512x128xf32> -> vector<512x128xf32>
    %c0_7 = arith.constant 0 : index
    %c0_8 = arith.constant 0 : index
    %8 = vector.load %arg4[%c0_7, %c0_8] : memref<2x128xf32, #tpu.memory_space<vmem>>, vector<1x128xf32>
    %9 = vector.broadcast %8 : vector<1x128xf32> to vector<512x128xf32>
    %10 = arith.addf %7, %9 : vector<512x128xf32>
    %cst_9 = arith.constant 0.000000e+00 : f32
    %11 = vector.broadcast %cst_9 : f32 to vector<512x128xf32>
    %12 = arith.maximumf %10, %11 : vector<512x128xf32>
    %13 = arith.truncf %12 : vector<512x128xf32> to vector<512x128xbf16>
    %c128 = arith.constant 128 : index
    %c0_10 = arith.constant 0 : index
    %14 = vector.load %arg3[%c128, %c0_10] : memref<256x128xbf16, #tpu.memory_space<vmem>>, vector<128x128xbf16>
    %cst_11 = arith.constant dense<0.000000e+00> : vector<512x128xf32>
    %15 = tpu.matmul %13, %14, %cst_11 {dimension_numbers = #tpu.dot_dimension_numbers<[1], [0], [0], [1], [0, 0, 1, 1], [], []>} : vector<512x128xbf16>, vector<128x128xbf16>, vector<512x128xf32> -> vector<512x128xf32>
    %c1 = arith.constant 1 : index
    %c0_12 = arith.constant 0 : index
    %16 = vector.load %arg4[%c1, %c0_12] : memref<2x128xf32, #tpu.memory_space<vmem>>, vector<1x128xf32>
    %17 = vector.broadcast %16 : vector<1x128xf32> to vector<512x128xf32>
    %18 = arith.addf %15, %17 : vector<512x128xf32>
    %cst_13 = arith.constant 0.000000e+00 : f32
    %19 = vector.broadcast %cst_13 : f32 to vector<512x128xf32>
    %20 = arith.maximumf %18, %19 : vector<512x128xf32>
    %c0_14 = arith.constant 0 : index
    %c0_15 = arith.constant 0 : index
    %21 = vector.load %arg5[%c0_14, %c0_15] : memref<128x4xf32, #tpu.memory_space<vmem>>, vector<128x4xf32>
    %cst_16 = arith.constant dense<0.000000e+00> : vector<512x4xf32>
    %22 = tpu.matmul %20, %21, %cst_16 {dimension_numbers = #tpu.dot_dimension_numbers<[1], [0], [0], [1], [0, 0, 1, 1], [], []>} : vector<512x128xf32>, vector<128x4xf32>, vector<512x4xf32> -> vector<512x4xf32>
    %c0_17 = arith.constant 0 : index
    %c0_18 = arith.constant 0 : index
    %23 = vector.load %arg6[%c0_17, %c0_18] : memref<1x4xf32, #tpu.memory_space<vmem>>, vector<1x4xf32>
    %24 = vector.broadcast %23 : vector<1x4xf32> to vector<512x4xf32>
    %25 = arith.addf %22, %24 : vector<512x4xf32>
    %c0_19 = arith.constant 0 : index
    %c0_20 = arith.constant 0 : index
    %26 = vector.load %arg7[%c0_19, %c0_20] : memref<512x4xf32, #tpu.memory_space<vmem>>, vector<512x4xf32>
    tpu.vector_store %arg7[%c0_19, %c0_20], %25 {strides = array<i32>} : memref<512x4xf32, #tpu.memory_space<vmem>>, vector<512x4xf32>,
    return
  }
  func.func @transform_0(%arg0: i32) -> (i32, i32) {
    %c0_i32 = arith.constant 0 : i32
    %c0_i32_0 = arith.constant 0 : i32
    return %arg0, %c0_i32 : i32, i32
  }
  func.func @transform_1(%arg0: i32) -> (i32, i32) {
    %c0_i32 = arith.constant 0 : i32
    %c0_i32_0 = arith.constant 0 : i32
    %c0_i32_1 = arith.constant 0 : i32
    return %c0_i32, %c0_i32_0 : i32, i32
  }
  func.func @transform_2(%arg0: i32) -> (i32, i32) {
    %c0_i32 = arith.constant 0 : i32
    %c0_i32_0 = arith.constant 0 : i32
    %c0_i32_1 = arith.constant 0 : i32
    return %c0_i32, %c0_i32_0 : i32, i32
  }
  func.func @transform_3(%arg0: i32) -> (i32, i32) {
    %c0_i32 = arith.constant 0 : i32
    %c0_i32_0 = arith.constant 0 : i32
    %c0_i32_1 = arith.constant 0 : i32
    return %c0_i32, %c0_i32_0 : i32, i32
  }
  func.func @transform_4(%arg0: i32) -> (i32, i32) {
    %c0_i32 = arith.constant 0 : i32
    %c0_i32_0 = arith.constant 0 : i32
    %c0_i32_1 = arith.constant 0 : i32
    return %c0_i32, %c0_i32_0 : i32, i32
  }
  func.func @transform_5(%arg0: i32) -> (i32, i32) {
    %c0_i32 = arith.constant 0 : i32
    %c0_i32_0 = arith.constant 0 : i32
    %c0_i32_1 = arith.constant 0 : i32
    return %c0_i32, %c0_i32_0 : i32, i32
  }
  func.func @transform_6(%arg0: i32) -> (i32, i32) {
    %c0_i32 = arith.constant 0 : i32
    %c0_i32_0 = arith.constant 0 : i32
    return %arg0, %c0_i32 : i32, i32
  }
}

</mosaic_0001>

<llo_original>
// kernel: aero_thermal_net_forward.1
$region0: #{aero_thermal_net_forward.1}
  #allocation0 [shape = 'u32[]', space=smem, size = 0x4, offset = 0x4, fixed_abs, tag = 'smem constant byte address 0x4 - core index']
  #allocation1 [shape = 'u32[144,128]{1,0:T(1,128)}', space=vmem, size = 0x12000, scoped, tag = 'internal scratch']
  %s0 = inlined_call_operand.vmem [shape: f32[2048,8], index: 0, kind: input, shape index: {}]
  %s1 = inlined_call_operand.vmem [shape: f32[8,128], index: 1, kind: input, shape index: {}]
  %s2 = inlined_call_operand.vmem [shape: bf16[256,128], index: 2, kind: input, shape index: {}]
  %s3 = inlined_call_operand.vmem [shape: f32[2,128], index: 3, kind: input, shape index: {}]
  %s4 = inlined_call_operand.vmem [shape: f32[128,4], index: 4, kind: input, shape index: {}]
  %s5 = inlined_call_operand.vmem [shape: f32[1,4], index: 5, kind: input, shape index: {}]
  %s6 = inlined_call_operand.vmem [shape: f32[2048,4], index: 6, kind: output, shape index: {}]
  %s7 = sld [smem:[#allocation0]]
  $region57: #{aero_thermal_net_forward.1} parent=0
    _
  %s9 = ssub.s32 1, %s7
  %s10 = scalar_select 0, %s9, %s7
  loop: start=0, step=1, limit=6
  $region2: #{aero_thermal_net_forward.1} parent=0 // loop_pre_header
    _
  $region3: #{aero_thermal_net_forward.1} parent=0 // loop_header
    %s12 = sphi 0, %s16
    %p13 = scmp.ge.s32.totalorder %s12, 6
    %s22 = sphi 0, %s24
    %s25 = sphi 0, %s22
    %s26 = sphi 0, %s25
    %s42 = sphi 0, %s26
    %s46 = sphi 0, %s46
    %s48 = sphi 0, %s46
    %s49 = sphi 0, %s48
    %s63 = sphi 0, %s49
    %s67 = sphi 0, %s67
    %s69 = sphi 0, %s67
    %s70 = sphi 0, %s69
    %s84 = sphi 0, %s70
    %s88 = sphi 0, %s88
    %s90 = sphi 0, %s88
    %s91 = sphi 0, %s90
    %s105 = sphi 0, %s91
    %s109 = sphi 0, %s109
    %s111 = sphi 0, %s109
    %s112 = sphi 0, %s111
    %s126 = sphi 0, %s112
    %s130 = sphi 0, %s130
    %s132 = sphi 0, %s130
    %s133 = sphi 0, %s132
    %s147 = sphi 0, %s133
    %s153 = sphi 0, %s155
    %s156 = sphi 0, %s153
    %s157 = sphi 0, %s156
    %s173 = sphi 0, %s157
  $region4: #{aero_thermal_net_forward.1} parent=0 // loop_header_branch
    %15 = sbr.rel (%p13) target = $region8
  $region5: #{aero_thermal_net_forward.1} parent=0 // loop_body
    %s17 = ssub.s32 %s12, 1
    %s18 = ssub.s32 %s12, 2
    %s19 = sadd.s32 %s12, 1
    %s20 = ssub.s32 %s12, %s19
    %p21 = scmp.eq.s32.totalorder %s20, 0
    %s23 = sadd.s32 %s22, 1
    %s24 = scalar_select %p21, %s22, %s23
    %p27 = pneg %p21
    %p28 = scmp.eq.s32.totalorder %s12, 3
    %p29 = por %p27, %p28
    %p30 = scmp.ne.s32.totalorder %s22, %s25
    %p31 = scmp.eq.s32.totalorder %s12, 0
    %p32 = por %p30, %p31
    %p33 = scmp.ne.s32.totalorder %s22, %s25
    %p34 = scmp.eq.s32.totalorder %s17, 3
    %p35 = por %p33, %p34
    %p36 = scmp.ne.s32.totalorder %s25, %s26
    %p37 = scmp.eq.s32.totalorder %s17, 0
    %p38 = por %p36, %p37
    %p39 = scmp.ne.s32.totalorder %s25, %s26
    %p40 = scmp.eq.s32.totalorder %s18, 3
    %p41 = por %p39, %p40
    %p43 = scmp.ne.s32.totalorder %s26, %s42
    %p44 = scmp.eq.s32.totalorder %s18, 0
    %p45 = por %p43, %p44
    %s47 = sadd.s32 %s46, 1
    %p50 = scmp.eq.s32.totalorder %s12, 3
    %p51 = scmp.ne.s32.totalorder %s46, %s48
    %p52 = scmp.eq.s32.totalorder %s12, 0
    %p53 = por %p51, %p52
    %p54 = scmp.ne.s32.totalorder %s46, %s48
    %p55 = scmp.eq.s32.totalorder %s17, 3
    %p56 = por %p54, %p55
    %p57 = scmp.ne.s32.totalorder %s48, %s49
    %p58 = scmp.eq.s32.totalorder %s17, 0
    %p59 = por %p57, %p58
    %p60 = scmp.ne.s32.totalorder %s48, %s49
    %p61 = scmp.eq.s32.totalorder %s18, 3
    %p62 = por %p60, %p61
    %p64 = scmp.ne.s32.totalorder %s49, %s63
    %p65 = scmp.eq.s32.totalorder %s18, 0
    %p66 = por %p64, %p65
    %s68 = sadd.s32 %s67, 1
    %p71 = scmp.eq.s32.totalorder %s12, 3
    %p72 = scmp.ne.s32.totalorder %s67, %s69
    %p73 = scmp.eq.s32.totalorder %s12, 0
    %p74 = por %p72, %p73
    %p75 = scmp.ne.s32.totalorder %s67, %s69
    %p76 = scmp.eq.s32.totalorder %s17, 3
    %p77 = por %p75, %p76
    %p78 = scmp.ne.s32.totalorder %s69, %s70
    %p79 = scmp.eq.s32.totalorder %s17, 0
    %p80 = por %p78, %p79
    %p81 = scmp.ne.s32.totalorder %s69, %s70
    %p82 = scmp.eq.s32.totalorder %s18, 3
    %p83 = por %p81, %p82
    %p85 = scmp.ne.s32.totalorder %s70, %s84
    %p86 = scmp.eq.s32.totalorder %s18, 0
    %p87 = por %p85, %p86
    %s89 = sadd.s32 %s88, 1
    %p92 = scmp.eq.s32.totalorder %s12, 3
    %p93 = scmp.ne.s32.totalorder %s88, %s90
    %p94 = scmp.eq.s32.totalorder %s12, 0
    %p95 = por %p93, %p94
    %p96 = scmp.ne.s32.totalorder %s88, %s90
    %p97 = scmp.eq.s32.totalorder %s17, 3
    %p98 = por %p96, %p97
    %p99 = scmp.ne.s32.totalorder %s90, %s91
    %p100 = scmp.eq.s32.totalorder %s17, 0
    %p101 = por %p99, %p100
    %p102 = scmp.ne.s32.totalorder %s90, %s91
    %p103 = scmp.eq.s32.totalorder %s18, 3
    %p104 = por %p102, %p103
    %p106 = scmp.ne.s32.totalorder %s91, %s105
    %p107 = scmp.eq.s32.totalorder %s18, 0
    %p108 = por %p106, %p107
    %s110 = sadd.s32 %s109, 1
    %p113 = scmp.eq.s32.totalorder %s12, 3
    %p114 = scmp.ne.s32.totalorder %s109, %s111
    %p115 = scmp.eq.s32.totalorder %s12, 0
    %p116 = por %p114, %p115
    %p117 = scmp.ne.s32.totalorder %s109, %s111
    %p118 = scmp.eq.s32.totalorder %s17, 3
    %p119 = por %p117, %p118
    %p120 = scmp.ne.s32.totalorder %s111, %s112
    %p121 = scmp.eq.s32.totalorder %s17, 0
    %p122 = por %p120, %p121
    %p123 = scmp.ne.s32.totalorder %s111, %s112
    %p124 = scmp.eq.s32.totalorder %s18, 3
    %p125 = por %p123, %p124
    %p127 = scmp.ne.s32.totalorder %s112, %s126
    %p128 = scmp.eq.s32.totalorder %s18, 0
    %p129 = por %p127, %p128
    %s131 = sadd.s32 %s130, 1
    %p134 = scmp.eq.s32.totalorder %s12, 3
    %p135 = scmp.ne.s32.totalorder %s130, %s132
    %p136 = scmp.eq.s32.totalorder %s12, 0
    %p137 = por %p135, %p136
    %p138 = scmp.ne.s32.totalorder %s130, %s132
    %p139 = scmp.eq.s32.totalorder %s17, 3
    %p140 = por %p138, %p139
    %p141 = scmp.ne.s32.totalorder %s132, %s133
    %p142 = scmp.eq.s32.totalorder %s17, 0
    %p143 = por %p141, %p142
    %p144 = scmp.ne.s32.totalorder %s132, %s133
    %p145 = scmp.eq.s32.totalorder %s18, 3
    %p146 = por %p144, %p145
    %p148 = scmp.ne.s32.totalorder %s133, %s147
    %p149 = scmp.eq.s32.totalorder %s18, 0
    %p150 = por %p148, %p149
    %s151 = ssub.s32 %s12, %s19
    %p152 = scmp.eq.s32.totalorder %s151, 0
    %s154 = sadd.s32 %s153, 1
    %s155 = scalar_select %p152, %s153, %s154
    %p158 = pneg %p152
    %p159 = scmp.eq.s32.totalorder %s12, 3
    %p160 = por %p158, %p159
    %p161 = scmp.ne.s32.totalorder %s153, %s156
    %p162 = scmp.eq.s32.totalorder %s12, 0
    %p163 = por %p161, %p162
    %p164 = scmp.ne.s32.totalorder %s153, %s156
    %p165 = scmp.eq.s32.totalorder %s17, 3
    %p166 = por %p164, %p165
    %p167 = scmp.ne.s32.totalorder %s156, %s157
    %p168 = scmp.eq.s32.totalorder %s17, 0
    %p169 = por %p167, %p168
    %p170 = scmp.ne.s32.totalorder %s156, %s157
    %p171 = scmp.eq.s32.totalorder %s18, 3
    %p172 = por %p170, %p171
    %p174 = scmp.ne.s32.totalorder %s157, %s173
    %p175 = scmp.eq.s32.totalorder %s18, 0
    %p176 = por %p174, %p175
    %p177 = scmp.le.s32.totalorder 1, %s12
    %p178 = scmp.lt.s32.totalorder %s12, 5
    %p179 = pnand %p177, %p178
    %p180 = pneg %p179
    // Predicated region
    $region9: #{aero_thermal_net_forward.1} parent=5 // pred_check
      _
    $region10: #{aero_thermal_net_forward.1} parent=5 // pred_check_branch
      %182 = sbr.rel (%p179) target = $region12
    $region11: #{aero_thermal_net_forward.1} parent=5 // pred_region
      %s183 = ssub.s32 %s12, 1
      // Predicated region
      $region13: #{aero_thermal_net_forward.1} parent=11 // pred_check
        %p184 = pneg %p59
      $region14: #{aero_thermal_net_forward.1} parent=11 // pred_check_branch
        %186 = sbr.rel (%p184) target = $region16
      $region15: #{aero_thermal_net_forward.1} parent=11 // pred_region
        _
      $region16: #{aero_thermal_net_forward.1} parent=11 // pred_fallthru
        _
      // Predicated region
      $region17: #{aero_thermal_net_forward.1} parent=11 // pred_check
        %p187 = pneg %p80
      $region18: #{aero_thermal_net_forward.1} parent=11 // pred_check_branch
        %189 = sbr.rel (%p187) target = $region20
      $region19: #{aero_thermal_net_forward.1} parent=11 // pred_region
        _
      $region20: #{aero_thermal_net_forward.1} parent=11 // pred_fallthru
        _
      // Predicated region
      $region21: #{aero_thermal_net_forward.1} parent=11 // pred_check
        %p190 = pneg %p101
      $region22: #{aero_thermal_net_forward.1} parent=11 // pred_check_branch
        %192 = sbr.rel (%p190) target = $region24
      $region23: #{aero_thermal_net_forward.1} parent=11 // pred_region
        _
      $region24: #{aero_thermal_net_forward.1} parent=11 // pred_fallthru
        _
      // Predicated region
      $region25: #{aero_thermal_net_forward.1} parent=11 // pred_check
        %p193 = pneg %p122
      $region26: #{aero_thermal_net_forward.1} parent=11 // pred_check_branch
        %195 = sbr.rel (%p193) target = $region28
      $region27: #{aero_thermal_net_forward.1} parent=11 // pred_region
        _
      $region28: #{aero_thermal_net_forward.1} parent=11 // pred_fallthru
        _
      // Predicated region
      $region29: #{aero_thermal_net_forward.1} parent=11 // pred_check
        %p196 = pneg %p143
      $region30: #{aero_thermal_net_forward.1} parent=11 // pred_check_branch
        %198 = sbr.rel (%p196) target = $region32
      $region31: #{aero_thermal_net_forward.1} parent=11 // pred_region
        _
      $region32: #{aero_thermal_net_forward.1} parent=11 // pred_fallthru
        _
    $region12: #{aero_thermal_net_forward.1} parent=5 // pred_fallthru
      _
    %p199 = scmp.lt.s32.totalorder %s12, 4
    // Predicated region
    $region33: #{aero_thermal_net_forward.1} parent=5 // pred_check
      %p200 = pneg %p199
    $region34: #{aero_thermal_net_forward.1} parent=5 // pred_check_branch
      %202 = sbr.rel (%p200) target = $region36
    $region35: #{aero_thermal_net_forward.1} parent=5 // pred_region
      // Predicated region
      $region37: #{aero_thermal_net_forward.1} parent=35 // pred_check
        %p203 = pneg %p32
      $region38: #{aero_thermal_net_forward.1} parent=35 // pred_check_branch
        %205 = sbr.rel (%p203) target = $region40
      $region39: #{aero_thermal_net_forward.1} parent=35 // pred_region
        %s206 = smul.u32 64, %s12
        %p207 = scmp.lt.s32.totalorder %s206, 255
        %s208 = scalar_select %p207, %s206, 255
        %s209 = smul.addr %s208, 8
        %s210 = scalar_lea.vmem %s0, %s209
        %s211 = smul.u32 64, %s12
      $region40: #{aero_thermal_net_forward.1} parent=35 // pred_fallthru
        _
    $region36: #{aero_thermal_net_forward.1} parent=5 // pred_fallthru
      _
    %p212 = scmp.le.s32.totalorder 1, %s12
    %p213 = scmp.lt.s32.totalorder %s12, 5
    %p214 = pnand %p212, %p213
    %p215 = pneg %p214
    // Predicated region
    $region41: #{aero_thermal_net_forward.1} parent=5 // pred_check
      _
    $region42: #{aero_thermal_net_forward.1} parent=5 // pred_check_branch
      %217 = sbr.rel (%p214) target = $region44
    $region43: #{aero_thermal_net_forward.1} parent=5 // pred_region
      %s218 = ssub.s32 %s12, 1
      %s219 = smul.u32 64, %s17
      %p220 = scmp.lt.s32.totalorder %s219, 255
      %s221 = scalar_select %p220, %s219, 255
      %s222 = smul.addr %s221, 8
      %s223 = scalar_lea.vmem %s0, %s222
      %p224 = pneg %p38
      %p225 = pneg %p35
      %p226 = pneg %p59
      %p227 = pneg %p56
      %p228 = pneg %p80
      %p229 = pneg %p77
      %p230 = pneg %p101
      %p231 = pneg %p98
      %p232 = pneg %p122
      %p233 = pneg %p119
      %p234 = pneg %p143
      %p235 = pneg %p140
      %p236 = pneg %p169
      %p237 = pneg %p166
      %s238 = smul.u32 64, %s17
      %p239 = scmp.lt.s32.totalorder %s238, 255
      %s240 = scalar_select %p239, %s238, 255
      %s241 = smul.addr %s240, 8
      %s242 = scalar_lea.vmem %s6, %s241
      %s243 = smul.u32 64, %s17
      %p244 = scmp.lt.s32.totalorder %s243, 255
      %s245 = scalar_select %p244, %s243, 255
      %s246 = smul.addr %s245, 8
      %s247 = scalar_lea.vmem %s0, %s246
      %s248 = smul.u32 64, %s17
      %s249 = smul.u32 64, %s17
      %p250 = scmp.lt.s32.totalorder %s249, 255
      %s251 = scalar_select %p250, %s249, 255
      %s252 = smul.addr %s251, 8
      %s253 = scalar_lea.vmem %s6, %s252
      %s254 = smul.u32 64, %s17
      %v256 = vld [vmem:[%s247] sm:$0xff]
      %v257 = vld [vmem:[%s247 + $0x8] sm:$0xff]
      %v258 = vld [vmem:[%s247 + $0x10] sm:$0xff]
      %v259 = vld [vmem:[%s247 + $0x18] sm:$0xff]
      %v260 = vld [vmem:[%s247 + $0x20] sm:$0xff]
      %v261 = vld [vmem:[%s247 + $0x28] sm:$0xff]
      %v262 = vld [vmem:[%s247 + $0x30] sm:$0xff]
      %v263 = vld [vmem:[%s247 + $0x38] sm:$0xff]
      %v264 = vld [vmem:[%s247 + $0x40] sm:$0xff]
      %v265 = vld [vmem:[%s247 + $0x48] sm:$0xff]
      %v266 = vld [vmem:[%s247 + $0x50] sm:$0xff]
      %v267 = vld [vmem:[%s247 + $0x58] sm:$0xff]
      %v268 = vld [vmem:[%s247 + $0x60] sm:$0xff]
      %v269 = vld [vmem:[%s247 + $0x68] sm:$0xff]
      %v270 = vld [vmem:[%s247 + $0x70] sm:$0xff]
      %v271 = vld [vmem:[%s247 + $0x78] sm:$0xff]
      %v272 = vld [vmem:[%s247 + $0x80] sm:$0xff]
      %v273 = vld [vmem:[%s247 + $0x88] sm:$0xff]
      %v274 = vld [vmem:[%s247 + $0x90] sm:$0xff]
      %v275 = vld [vmem:[%s247 + $0x98] sm:$0xff]
      %v276 = vld [vmem:[%s247 + $0xa0] sm:$0xff]
      %v277 = vld [vmem:[%s247 + $0xa8] sm:$0xff]
      %v278 = vld [vmem:[%s247 + $0xb0] sm:$0xff]
      %v279 = vld [vmem:[%s247 + $0xb8] sm:$0xff]
      %v280 = vld [vmem:[%s247 + $0xc0] sm:$0xff]
      %v281 = vld [vmem:[%s247 + $0xc8] sm:$0xff]
      %v282 = vld [vmem:[%s247 + $0xd0] sm:$0xff]
      %v283 = vld [vmem:[%s247 + $0xd8] sm:$0xff]
      %v284 = vld [vmem:[%s247 + $0xe0] sm:$0xff]
      %v285 = vld [vmem:[%s247 + $0xe8] sm:$0xff]
      %v286 = vld [vmem:[%s247 + $0xf0] sm:$0xff]
      %v287 = vld [vmem:[%s247 + $0xf8] sm:$0xff]
      %v288 = vld [vmem:[%s247 + $0x100] sm:$0xff]
      %v289 = vld [vmem:[%s247 + $0x108] sm:$0xff]
      %v290 = vld [vmem:[%s247 + $0x110] sm:$0xff]
      %v291 = vld [vmem:[%s247 + $0x118] sm:$0xff]
      %v292 = vld [vmem:[%s247 + $0x120] sm:$0xff]
      %v293 = vld [vmem:[%s247 + $0x128] sm:$0xff]
      %v294 = vld [vmem:[%s247 + $0x130] sm:$0xff]
      %v295 = vld [vmem:[%s247 + $0x138] sm:$0xff]
      %v296 = vld [vmem:[%s247 + $0x140] sm:$0xff]
      %v297 = vld [vmem:[%s247 + $0x148] sm:$0xff]
      %v298 = vld [vmem:[%s247 + $0x150] sm:$0xff]
      %v299 = vld [vmem:[%s247 + $0x158] sm:$0xff]
      %v300 = vld [vmem:[%s247 + $0x160] sm:$0xff]
      %v301 = vld [vmem:[%s247 + $0x168] sm:$0xff]
      %v302 = vld [vmem:[%s247 + $0x170] sm:$0xff]
      %v303 = vld [vmem:[%s247 + $0x178] sm:$0xff]
      %v304 = vld [vmem:[%s247 + $0x180] sm:$0xff]
      %v305 = vld [vmem:[%s247 + $0x188] sm:$0xff]
      %v306 = vld [vmem:[%s247 + $0x190] sm:$0xff]
      %v307 = vld [vmem:[%s247 + $0x198] sm:$0xff]
      %v308 = vld [vmem:[%s247 + $0x1a0] sm:$0xff]
      %v309 = vld [vmem:[%s247 + $0x1a8] sm:$0xff]
      %v310 = vld [vmem:[%s247 + $0x1b0] sm:$0xff]
      %v311 = vld [vmem:[%s247 + $0x1b8] sm:$0xff]
      %v312 = vld [vmem:[%s247 + $0x1c0] sm:$0xff]
      %v313 = vld [vmem:[%s247 + $0x1c8] sm:$0xff]
      %v314 = vld [vmem:[%s247 + $0x1d0] sm:$0xff]
      %v315 = vld [vmem:[%s247 + $0x1d8] sm:$0xff]
      %v316 = vld [vmem:[%s247 + $0x1e0] sm:$0xff]
      %v317 = vld [vmem:[%s247 + $0x1e8] sm:$0xff]
      %v318 = vld [vmem:[%s247 + $0x1f0] sm:$0xff]
      %v319 = vld [vmem:[%s247 + $0x1f8] sm:$0xff]
      %v320 = vld [vmem:[%s1] sm:$0xff]
      %vm321 = vcmask 64512
      %v323 = vsel %vm321, %v256, 0
      %v326 = vsel %vm321, %v257, 0
      %v329 = vsel %vm321, %v258, 0
      %v332 = vsel %vm321, %v259, 0
      %v335 = vsel %vm321, %v260, 0
      %v338 = vsel %vm321, %v261, 0
      %v341 = vsel %vm321, %v262, 0
      %v344 = vsel %vm321, %v263, 0
      %v347 = vsel %vm321, %v264, 0
      %v350 = vsel %vm321, %v265, 0
      %v353 = vsel %vm321, %v266, 0
      %v356 = vsel %vm321, %v267, 0
      %v359 = vsel %vm321, %v268, 0
      %v362 = vsel %vm321, %v269, 0
      %v365 = vsel %vm321, %v270, 0
      %v368 = vsel %vm321, %v271, 0
      %v371 = vsel %vm321, %v272, 0
      %v374 = vsel %vm321, %v273, 0
      %v377 = vsel %vm321, %v274, 0
      %v380 = vsel %vm321, %v275, 0
      %v383 = vsel %vm321, %v276, 0
      %v386 = vsel %vm321, %v277, 0
      %v389 = vsel %vm321, %v278, 0
      %v392 = vsel %vm321, %v279, 0
      %v395 = vsel %vm321, %v280, 0
      %v398 = vsel %vm321, %v281, 0
      %v401 = vsel %vm321, %v282, 0
      %v404 = vsel %vm321, %v283, 0
      %v407 = vsel %vm321, %v284, 0
      %v410 = vsel %vm321, %v285, 0
      %v413 = vsel %vm321, %v286, 0
      %v416 = vsel %vm321, %v287, 0
      %v419 = vsel %vm321, %v288, 0
      %v422 = vsel %vm321, %v289, 0
      %v425 = vsel %vm321, %v290, 0
      %v428 = vsel %vm321, %v291, 0
      %v431 = vsel %vm321, %v292, 0
      %v434 = vsel %vm321, %v293, 0
      %v437 = vsel %vm321, %v294, 0
      %v440 = vsel %vm321, %v295, 0
      %v443 = vsel %vm321, %v296, 0
      %v446 = vsel %vm321, %v297, 0
      %v449 = vsel %vm321, %v298, 0
      %v452 = vsel %vm321, %v299, 0
      %v455 = vsel %vm321, %v300, 0
      %v458 = vsel %vm321, %v301, 0
      %v461 = vsel %vm321, %v302, 0
      %v464 = vsel %vm321, %v303, 0
      %v467 = vsel %vm321, %v304, 0
      %v470 = vsel %vm321, %v305, 0
      %v473 = vsel %vm321, %v306, 0
      %v476 = vsel %vm321, %v307, 0
      %v479 = vsel %vm321, %v308, 0
      %v482 = vsel %vm321, %v309, 0
      %v485 = vsel %vm321, %v310, 0
      %v488 = vsel %vm321, %v311, 0
      %v491 = vsel %vm321, %v312, 0
      %v494 = vsel %vm321, %v313, 0
      %v497 = vsel %vm321, %v314, 0
      %v500 = vsel %vm321, %v315, 0
      %v503 = vsel %vm321, %v316, 0
      %v506 = vsel %vm321, %v317, 0
      %v509 = vsel %vm321, %v318, 0
      %v512 = vsel %vm321, %v319, 0
      %514 = vmatprep.subr.mxu0 0.0
      %515 = vmatpush1.msra.mxu0 %v320
      %516 = vmatprep.subr.mxu0 0.0
      %517 = vmatpush1.msra.mxu0 0.0
      %518 = vmatprep.subr.mxu0 0.0
      %519 = vmatpush1.msra.mxu0 0.0
      %520 = vmatprep.subr.mxu0 0.0
      %521 = vmatpush1.msra.mxu0 0.0
      %522 = vmatprep.subr.mxu0 0.0
      %523 = vmatpush1.msra.mxu0 0.0
      %524 = vmatprep.subr.mxu0 0.0
      %525 = vmatpush1.msra.mxu0 0.0
      %526 = vmatprep.subr.mxu0 0.0
      %527 = vmatpush1.msra.mxu0 0.0
      %528 = vmatprep.subr.mxu0 0.0
      %529 = vmatpush1.msra.mxu0 0.0
      %530 = vmatprep.subr.mxu0 0.0
      %531 = vmatpush1.msra.mxu0 0.0
      %532 = vmatprep.subr.mxu0 0.0
      %533 = vmatpush1.msra.mxu0 0.0
      %534 = vmatprep.subr.mxu0 0.0
      %535 = vmatpush1.msra.mxu0 0.0
      %536 = vmatprep.subr.mxu0 0.0
      %537 = vmatpush1.msra.mxu0 0.0
      %538 = vmatprep.subr.mxu0 0.0
      %539 = vmatpush1.msra.mxu0 0.0
      %540 = vmatprep.subr.mxu0 0.0
      %541 = vmatpush1.msra.mxu0 0.0
      %542 = vmatprep.subr.mxu0 0.0
      %543 = vmatpush1.msra.mxu0 0.0
      %544 = vmatprep.subr.mxu0 0.0
      %545 = vmatpush1.msra.mxu0 0.0
      %546 = vmatprep.subr.mxu0 0.0
      %547 = vmatpush1.msra.mxu0 0.0
      %548 = vmatprep.subr.mxu0 0.0
      %549 = vmatpush1.msra.mxu0 0.0
      %550 = vmatprep.subr.mxu0 0.0
      %551 = vmatpush1.msra.mxu0 0.0
      %552 = vmatprep.subr.mxu0 0.0
      %553 = vmatpush1.msra.mxu0 0.0
      %554 = vmatprep.subr.mxu0 0.0
      %555 = vmatpush1.msra.mxu0 0.0
      %556 = vmatprep.subr.mxu0 0.0
      %557 = vmatpush1.msra.mxu0 0.0
      %558 = vmatprep.subr.mxu0 0.0
      %559 = vmatpush1.msra.mxu0 0.0
      %560 = vmatprep.subr.mxu0 0.0
      %561 = vmatpush1.msra.mxu0 0.0
      %562 = vmatprep.subr.mxu0 0.0
      %563 = vmatpush1.msra.mxu0 0.0
      %564 = vmatprep.subr.mxu0 0.0
      %565 = vmatpush1.msra.mxu0 0.0
      %566 = vmatprep.subr.mxu0 0.0
      %567 = vmatpush1.msra.mxu0 0.0
      %568 = vmatprep.subr.mxu0 0.0
      %569 = vmatpush1.msra.mxu0 0.0
      %570 = vmatprep.subr.mxu0 0.0
      %571 = vmatpush1.msra.mxu0 0.0
      %572 = vmatprep.subr.mxu0 0.0
      %573 = vmatpush1.msra.mxu0 0.0
      %574 = vmatprep.subr.mxu0 0.0
      %575 = vmatpush1.msra.mxu0 0.0
      %576 = vmatprep.subr.mxu0 0.0
      %577 = vmatpush1.msra.mxu0 0.0
      %578 = vmatprep.mubr.f32.mxu0 0.0
      %579 = vmatmul.mubr.f32.gmra.mrb[0].mxu0 %v323
      %v580 = vpop.f32.mrb[0].mxu0
      %v581 = vadd.f32 0.0, %v580
      %v582 = vpop.f32.mrb[0].mxu0
      %583 = vmatprep.mubr.f32.mxu0 0.0
      %584 = vmatmul.mubr.f32.gmra.mrb[0].mxu0 %v326
      %v585 = vpop.f32.mrb[0].mxu0
      %v586 = vadd.f32 0.0, %v585
      %v587 = vpop.f32.mrb[0].mxu0
      %588 = vmatprep.mubr.f32.mxu0 0.0
      %589 = vmatmul.mubr.f32.gmra.mrb[0].mxu0 %v329
      %v590 = vpop.f32.mrb[0].mxu0
      %v591 = vadd.f32 0.0, %v590
      %v592 = vpop.f32.mrb[0].mxu0
      %593 = vmatprep.mubr.f32.mxu0 0.0
      %594 = vmatmul.mubr.f32.gmra.mrb[0].mxu0 %v332
      %v595 = vpop.f32.mrb[0].mxu0
      %v596 = vadd.f32 0.0, %v595
      %v597 = vpop.f32.mrb[0].mxu0
      %598 = vmatprep.mubr.f32.mxu0 0.0
      %599 = vmatmul.mubr.f32.gmra.mrb[0].mxu0 %v335
      %v600 = vpop.f32.mrb[0].mxu0
      %v601 = vadd.f32 0.0, %v600
      %v602 = vpop.f32.mrb[0].mxu0
      %603 = vmatprep.mubr.f32.mxu0 0.0
      %604 = vmatmul.mubr.f32.gmra.mrb[0].mxu0 %v338
      %v605 = vpop.f32.mrb[0].mxu0
      %v606 = vadd.f32 0.0, %v605
      %v607 = vpop.f32.mrb[0].mxu0
      %608 = vmatprep.mubr.f32.mxu0 0.0
      %609 = vmatmul.mubr.f32.gmra.mrb[0].mxu0 %v341
      %v610 = vpop.f32.mrb[0].mxu0
      %v611 = vadd.f32 0.0, %v610
      %v612 = vpop.f32.mrb[0].mxu0
      %613 = vmatprep.mubr.f32.mxu0 0.0
      %614 = vmatmul.mubr.f32.gmra.mrb[0].mxu0 %v344
      %v615 = vpop.f32.mrb[0].mxu0
      %v616 = vadd.f32 0.0, %v615
      %v617 = vpop.f32.mrb[0].mxu0
      %618 = vmatprep.mubr.f32.mxu0 0.0
      %619 = vmatmul.mubr.f32.gmra.mrb[0].mxu0 %v347
      %v620 = vpop.f32.mrb[0].mxu0
      %v621 = vadd.f32 0.0, %v620
      %v622 = vpop.f32.mrb[0].mxu0
      %623 = vmatprep.mubr.f32.mxu0 0.0
      %624 = vmatmul.mubr.f32.gmra.mrb[0].mxu0 %v350
      %v625 = vpop.f32.mrb[0].mxu0
      %v626 = vadd.f32 0.0, %v625
      %v627 = vpop.f32.mrb[0].mxu0
      %628 = vmatprep.mubr.f32.mxu0 0.0
      %629 = vmatmul.mubr.f32.gmra.mrb[0].mxu0 %v353
      %v630 = vpop.f32.mrb[0].mxu0
      %v631 = vadd.f32 0.0, %v630
      %v632 = vpop.f32.mrb[0].mxu0
      %633 = vmatprep.mubr.f32.mxu0 0.0
      %634 = vmatmul.mubr.f32.gmra.mrb[0].mxu0 %v356
      %v635 = vpop.f32.mrb[0].mxu0
      %v636 = vadd.f32 0.0, %v635
      %v637 = vpop.f32.mrb[0].mxu0
      %638 = vmatprep.mubr.f32.mxu0 0.0
      %639 = vmatmul.mubr.f32.gmra.mrb[0].mxu0 %v359
      %v640 = vpop.f32.mrb[0].mxu0
      %v641 = vadd.f32 0.0, %v640
      %v642 = vpop.f32.mrb[0].mxu0
      %643 = vmatprep.mubr.f32.mxu0 0.0
      %644 = vmatmul.mubr.f32.gmra.mrb[0].mxu0 %v362
      %v645 = vpop.f32.mrb[0].mxu0
      %v646 = vadd.f32 0.0, %v645
      %v647 = vpop.f32.mrb[0].mxu0
      %648 = vmatprep.mubr.f32.mxu0 0.0
      %649 = vmatmul.mubr.f32.gmra.mrb[0].mxu0 %v365
      %v650 = vpop.f32.mrb[0].mxu0
      %v651 = vadd.f32 0.0, %v650
      %v652 = vpop.f32.mrb[0].mxu0
      %653 = vmatprep.mubr.f32.mxu0 0.0
      %654 = vmatmul.mubr.f32.gmra.mrb[0].mxu0 %v368
      %v655 = vpop.f32.mrb[0].mxu0
      %v656 = vadd.f32 0.0, %v655
      %v657 = vpop.f32.mrb[0].mxu0
      %658 = vmatprep.mubr.f32.mxu0 0.0
      %659 = vmatmul.mubr.f32.gmra.mrb[0].mxu0 %v371
      %v660 = vpop.f32.mrb[0].mxu0
      %v661 = vadd.f32 0.0, %v660
      %v662 = vpop.f32.mrb[0].mxu0
      %663 = vmatprep.mubr.f32.mxu0 0.0
      %664 = vmatmul.mubr.f32.gmra.mrb[0].mxu0 %v374
      %v665 = vpop.f32.mrb[0].mxu0
      %v666 = vadd.f32 0.0, %v665
      %v667 = vpop.f32.mrb[0].mxu0
      %668 = vmatprep.mubr.f32.mxu0 0.0
      %669 = vmatmul.mubr.f32.gmra.mrb[0].mxu0 %v377
      %v670 = vpop.f32.mrb[0].mxu0
      %v671 = vadd.f32 0.0, %v670
      %v672 = vpop.f32.mrb[0].mxu0
      %673 = vmatprep.mubr.f32.mxu0 0.0
      %674 = vmatmul.mubr.f32.gmra.mrb[0].mxu0 %v380
      %v675 = vpop.f32.mrb[0].mxu0
      %v676 = vadd.f32 0.0, %v675
      %v677 = vpop.f32.mrb[0].mxu0
      %678 = vmatprep.mubr.f32.mxu0 0.0
      %679 = vmatmul.mubr.f32.gmra.mrb[0].mxu0 %v383
      %v680 = vpop.f32.mrb[0].mxu0
      %v681 = vadd.f32 0.0, %v680
      %v682 = vpop.f32.mrb[0].mxu0
      %683 = vmatprep.mubr.f32.mxu0 0.0
      %684 = vmatmul.mubr.f32.gmra.mrb[0].mxu0 %v386
      %v685 = vpop.f32.mrb[0].mxu0
      %v686 = vadd.f32 0.0, %v685
      %v687 = vpop.f32.mrb[0].mxu0
      %688 = vmatprep.mubr.f32.mxu0 0.0
      %689 = vmatmul.mubr.f32.gmra.mrb[0].mxu0 %v389
      %v690 = vpop.f32.mrb[0].mxu0
      %v691 = vadd.f32 0.0, %v690
      %v692 = vpop.f32.mrb[0].mxu0
      %693 = vmatprep.mubr.f32.mxu0 0.0
      %694 = vmatmul.mubr.f32.gmra.mrb[0].mxu0 %v392
      %v695 = vpop.f32.mrb[0].mxu0
      %v696 = vadd.f32 0.0, %v695
      %v697 = vpop.f32.mrb[0].mxu0
      %698 = vmatprep.mubr.f32.mxu0 0.0
      %699 = vmatmul.mubr.f32.gmra.mrb[0].mxu0 %v395
      %v700 = vpop.f32.mrb[0].mxu0
      %v701 = vadd.f32 0.0, %v700
      %v702 = vpop.f32.mrb[0].mxu0
      %703 = vmatprep.mubr.f32.mxu0 0.0
      %704 = vmatmul.mubr.f32.gmra.mrb[0].mxu0 %v398
      %v705 = vpop.f32.mrb[0].mxu0
      %v706 = vadd.f32 0.0, %v705
      %v707 = vpop.f32.mrb[0].mxu0
      %708 = vmatprep.mubr.f32.mxu0 0.0
      %709 = vmatmul.mubr.f32.gmra.mrb[0].mxu0 %v401
      %v710 = vpop.f32.mrb[0].mxu0
      %v711 = vadd.f32 0.0, %v710
      %v712 = vpop.f32.mrb[0].mxu0
      %713 = vmatprep.mubr.f32.mxu0 0.0
      %714 = vmatmul.mubr.f32.gmra.mrb[0].mxu0 %v404
      %v715 = vpop.f32.mrb[0].mxu0
      %v716 = vadd.f32 0.0, %v715
      %v717 = vpop.f32.mrb[0].mxu0
      %718 = vmatprep.mubr.f32.mxu0 0.0
      %719 = vmatmul.mubr.f32.gmra.mrb[0].mxu0 %v407
      %v720 = vpop.f32.mrb[0].mxu0
      %v721 = vadd.f32 0.0, %v720
      %v722 = vpop.f32.mrb[0].mxu0
      %723 = vmatprep.mubr.f32.mxu0 0.0
      %724 = vmatmul.mubr.f32.gmra.mrb[0].mxu0 %v410
      %v725 = vpop.f32.mrb[0].mxu0
      %v726 = vadd.f32 0.0, %v725
      %v727 = vpop.f32.mrb[0].mxu0
      %728 = vmatprep.mubr.f32.mxu0 0.0
      %729 = vmatmul.mubr.f32.gmra.mrb[0].mxu0 %v413
      %v730 = vpop.f32.mrb[0].mxu0
      %v731 = vadd.f32 0.0, %v730
      %v732 = vpop.f32.mrb[0].mxu0
      %733 = vmatprep.mubr.f32.mxu0 0.0
      %734 = vmatmul.mubr.f32.gmra.mrb[0].mxu0 %v416
      %v735 = vpop.f32.mrb[0].mxu0
      %v736 = vadd.f32 0.0, %v735
      %v737 = vpop.f32.mrb[0].mxu0
      %738 = vmatprep.mubr.f32.mxu0 0.0
      %739 = vmatmul.mubr.f32.gmra.mrb[0].mxu0 %v419
      %v740 = vpop.f32.mrb[0].mxu0
      %v741 = vadd.f32 0.0, %v740
      %v742 = vpop.f32.mrb[0].mxu0
      %743 = vmatprep.mubr.f32.mxu0 0.0
      %744 = vmatmul.mubr.f32.gmra.mrb[0].mxu0 %v422
      %v745 = vpop.f32.mrb[0].mxu0
      %v746 = vadd.f32 0.0, %v745
      %v747 = vpop.f32.mrb[0].mxu0
      %748 = vmatprep.mubr.f32.mxu0 0.0
      %749 = vmatmul.mubr.f32.gmra.mrb[0].mxu0 %v425
      %v750 = vpop.f32.mrb[0].mxu0
      %v751 = vadd.f32 0.0, %v750
      %v752 = vpop.f32.mrb[0].mxu0
      %753 = vmatprep.mubr.f32.mxu0 0.0
      %754 = vmatmul.mubr.f32.gmra.mrb[0].mxu0 %v428
      %v755 = vpop.f32.mrb[0].mxu0
      %v756 = vadd.f32 0.0, %v755
      %v757 = vpop.f32.mrb[0].mxu0
      %758 = vmatprep.mubr.f32.mxu0 0.0
      %759 = vmatmul.mubr.f32.gmra.mrb[0].mxu0 %v431
      %v760 = vpop.f32.mrb[0].mxu0
      %v761 = vadd.f32 0.0, %v760
      %v762 = vpop.f32.mrb[0].mxu0
      %763 = vmatprep.mubr.f32.mxu0 0.0
      %764 = vmatmul.mubr.f32.gmra.mrb[0].mxu0 %v434
      %v765 = vpop.f32.mrb[0].mxu0
      %v766 = vadd.f32 0.0, %v765
      %v767 = vpop.f32.mrb[0].mxu0
      %768 = vmatprep.mubr.f32.mxu0 0.0
      %769 = vmatmul.mubr.f32.gmra.mrb[0].mxu0 %v437
      %v770 = vpop.f32.mrb[0].mxu0
      %v771 = vadd.f32 0.0, %v770
      %v772 = vpop.f32.mrb[0].mxu0
      %773 = vmatprep.mubr.f32.mxu0 0.0
      %774 = vmatmul.mubr.f32.gmra.mrb[0].mxu0 %v440
      %v775 = vpop.f32.mrb[0].mxu0
      %v776 = vadd.f32 0.0, %v775
      %v777 = vpop.f32.mrb[0].mxu0
      %778 = vmatprep.mubr.f32.mxu0 0.0
      %779 = vmatmul.mubr.f32.gmra.mrb[0].mxu0 %v443
      %v780 = vpop.f32.mrb[0].mxu0
      %v781 = vadd.f32 0.0, %v780
      %v782 = vpop.f32.mrb[0].mxu0
      %783 = vmatprep.mubr.f32.mxu0 0.0
      %784 = vmatmul.mubr.f32.gmra.mrb[0].mxu0 %v446
      %v785 = vpop.f32.mrb[0].mxu0
      %v786 = vadd.f32 0.0, %v785
      %v787 = vpop.f32.mrb[0].mxu0
      %788 = vmatprep.mubr.f32.mxu0 0.0
      %789 = vmatmul.mubr.f32.gmra.mrb[0].mxu0 %v449
      %v790 = vpop.f32.mrb[0].mxu0
      %v791 = vadd.f32 0.0, %v790
      %v792 = vpop.f32.mrb[0].mxu0
      %793 = vmatprep.mubr.f32.mxu0 0.0
      %794 = vmatmul.mubr.f32.gmra.mrb[0].mxu0 %v452
      %v795 = vpop.f32.mrb[0].mxu0
      %v796 = vadd.f32 0.0, %v795
      %v797 = vpop.f32.mrb[0].mxu0
      %798 = vmatprep.mubr.f32.mxu0 0.0
      %799 = vmatmul.mubr.f32.gmra.mrb[0].mxu0 %v455
      %v800 = vpop.f32.mrb[0].mxu0
      %v801 = vadd.f32 0.0, %v800
      %v802 = vpop.f32.mrb[0].mxu0
      %803 = vmatprep.mubr.f32.mxu0 0.0
      %804 = vmatmul.mubr.f32.gmra.mrb[0].mxu0 %v458
      %v805 = vpop.f32.mrb[0].mxu0
      %v806 = vadd.f32 0.0, %v805
      %v807 = vpop.f32.mrb[0].mxu0
      %808 = vmatprep.mubr.f32.mxu0 0.0
      %809 = vmatmul.mubr.f32.gmra.mrb[0].mxu0 %v461
      %v810 = vpop.f32.mrb[0].mxu0
      %v811 = vadd.f32 0.0, %v810
      %v812 = vpop.f32.mrb[0].mxu0
      %813 = vmatprep.mubr.f32.mxu0 0.0
      %814 = vmatmul.mubr.f32.gmra.mrb[0].mxu0 %v464
      %v815 = vpop.f32.mrb[0].mxu0
      %v816 = vadd.f32 0.0, %v815
      %v817 = vpop.f32.mrb[0].mxu0
      %818 = vmatprep.mubr.f32.mxu0 0.0
      %819 = vmatmul.mubr.f32.gmra.mrb[0].mxu0 %v467
      %v820 = vpop.f32.mrb[0].mxu0
      %v821 = vadd.f32 0.0, %v820
      %v822 = vpop.f32.mrb[0].mxu0
      %823 = vmatprep.mubr.f32.mxu0 0.0
      %824 = vmatmul.mubr.f32.gmra.mrb[0].mxu0 %v470
      %v825 = vpop.f32.mrb[0].mxu0
      %v826 = vadd.f32 0.0, %v825
      %v827 = vpop.f32.mrb[0].mxu0
      %828 = vmatprep.mubr.f32.mxu0 0.0
      %829 = vmatmul.mubr.f32.gmra.mrb[0].mxu0 %v473
      %v830 = vpop.f32.mrb[0].mxu0
      %v831 = vadd.f32 0.0, %v830
      %v832 = vpop.f32.mrb[0].mxu0
      %833 = vmatprep.mubr.f32.mxu0 0.0
      %834 = vmatmul.mubr.f32.gmra.mrb[0].mxu0 %v476
      %v835 = vpop.f32.mrb[0].mxu0
      %v836 = vadd.f32 0.0, %v835
      %v837 = vpop.f32.mrb[0].mxu0
      %838 = vmatprep.mubr.f32.mxu0 0.0
      %839 = vmatmul.mubr.f32.gmra.mrb[0].mxu0 %v479
      %v840 = vpop.f32.mrb[0].mxu0
      %v841 = vadd.f32 0.0, %v840
      %v842 = vpop.f32.mrb[0].mxu0
      %843 = vmatprep.mubr.f32.mxu0 0.0
      %844 = vmatmul.mubr.f32.gmra.mrb[0].mxu0 %v482
      %v845 = vpop.f32.mrb[0].mxu0
      %v846 = vadd.f32 0.0, %v845
      %v847 = vpop.f32.mrb[0].mxu0
      %848 = vmatprep.mubr.f32.mxu0 0.0
      %849 = vmatmul.mubr.f32.gmra.mrb[0].mxu0 %v485
      %v850 = vpop.f32.mrb[0].mxu0
      %v851 = vadd.f32 0.0, %v850
      %v852 = vpop.f32.mrb[0].mxu0
      %853 = vmatprep.mubr.f32.mxu0 0.0
      %854 = vmatmul.mubr.f32.gmra.mrb[0].mxu0 %v488
      %v855 = vpop.f32.mrb[0].mxu0
      %v856 = vadd.f32 0.0, %v855
      %v857 = vpop.f32.mrb[0].mxu0
      %858 = vmatprep.mubr.f32.mxu0 0.0
      %859 = vmatmul.mubr.f32.gmra.mrb[0].mxu0 %v491
      %v860 = vpop.f32.mrb[0].mxu0
      %v861 = vadd.f32 0.0, %v860
      %v862 = vpop.f32.mrb[0].mxu0
      %863 = vmatprep.mubr.f32.mxu0 0.0
      %864 = vmatmul.mubr.f32.gmra.mrb[0].mxu0 %v494
      %v865 = vpop.f32.mrb[0].mxu0
      %v866 = vadd.f32 0.0, %v865
      %v867 = vpop.f32.mrb[0].mxu0
      %868 = vmatprep.mubr.f32.mxu0 0.0
      %869 = vmatmul.mubr.f32.gmra.mrb[0].mxu0 %v497
      %v870 = vpop.f32.mrb[0].mxu0
      %v871 = vadd.f32 0.0, %v870
      %v872 = vpop.f32.mrb[0].mxu0
      %873 = vmatprep.mubr.f32.mxu0 0.0
      %874 = vmatmul.mubr.f32.gmra.mrb[0].mxu0 %v500
      %v875 = vpop.f32.mrb[0].mxu0
      %v876 = vadd.f32 0.0, %v875
      %v877 = vpop.f32.mrb[0].mxu0
      %878 = vmatprep.mubr.f32.mxu0 0.0
      %879 = vmatmul.mubr.f32.gmra.mrb[0].mxu0 %v503
      %v880 = vpop.f32.mrb[0].mxu0
      %v881 = vadd.f32 0.0, %v880
      %v882 = vpop.f32.mrb[0].mxu0
      %883 = vmatprep.mubr.f32.mxu0 0.0
      %884 = vmatmul.mubr.f32.gmra.mrb[0].mxu0 %v506
      %v885 = vpop.f32.mrb[0].mxu0
      %v886 = vadd.f32 0.0, %v885
      %v887 = vpop.f32.mrb[0].mxu0
      %888 = vmatprep.mubr.f32.mxu0 0.0
      %889 = vmatmul.mubr.f32.gmra.mrb[0].mxu0 %v509
      %v890 = vpop.f32.mrb[0].mxu0
      %v891 = vadd.f32 0.0, %v890
      %v892 = vpop.f32.mrb[0].mxu0
      %893 = vmatprep.mubr.f32.mxu0 0.0
      %894 = vmatmul.mubr.f32.gmra.mrb[0].mxu0 %v512
      %v895 = vpop.f32.mrb[0].mxu0
      %v896 = vadd.f32 0.0, %v895
      %v897 = vpop.f32.mrb[0].mxu0
      %898 = vdwg.mxu0
      %v899 = vmax.f32 %v581, 0.0
      %v900 = vmax.f32 %v586, 0.0
      %v901 = vmax.f32 %v591, 0.0
      %v902 = vmax.f32 %v596, 0.0
      %v903 = vmax.f32 %v601, 0.0
      %v904 = vmax.f32 %v606, 0.0
      %v905 = vmax.f32 %v611, 0.0
      %v906 = vmax.f32 %v616, 0.0
      %v907 = vmax.f32 %v621, 0.0
      %v908 = vmax.f32 %v626, 0.0
      %v909 = vmax.f32 %v631, 0.0
      %v910 = vmax.f32 %v636, 0.0
      %v911 = vmax.f32 %v641, 0.0
      %v912 = vmax.f32 %v646, 0.0
      %v913 = vmax.f32 %v651, 0.0
      %v914 = vmax.f32 %v656, 0.0
      %v915 = vmax.f32 %v661, 0.0
      %v916 = vmax.f32 %v666, 0.0
      %v917 = vmax.f32 %v671, 0.0
      %v918 = vmax.f32 %v676, 0.0
      %v919 = vmax.f32 %v681, 0.0
      %v920 = vmax.f32 %v686, 0.0
      %v921 = vmax.f32 %v691, 0.0
      %v922 = vmax.f32 %v696, 0.0
      %v923 = vmax.f32 %v701, 0.0
      %v924 = vmax.f32 %v706, 0.0
      %v925 = vmax.f32 %v711, 0.0
      %v926 = vmax.f32 %v716, 0.0
      %v927 = vmax.f32 %v721, 0.0
      %v928 = vmax.f32 %v726, 0.0
      %v929 = vmax.f32 %v731, 0.0
      %v930 = vmax.f32 %v736, 0.0
      %v931 = vmax.f32 %v741, 0.0
      %v932 = vmax.f32 %v746, 0.0
      %v933 = vmax.f32 %v751, 0.0
      %v934 = vmax.f32 %v756, 0.0
      %v935 = vmax.f32 %v761, 0.0
      %v936 = vmax.f32 %v766, 0.0
      %v937 = vmax.f32 %v771, 0.0
      %v938 = vmax.f32 %v776, 0.0
      %v939 = vmax.f32 %v781, 0.0
      %v940 = vmax.f32 %v786, 0.0
      %v941 = vmax.f32 %v791, 0.0
      %v942 = vmax.f32 %v796, 0.0
      %v943 = vmax.f32 %v801, 0.0
      %v944 = vmax.f32 %v806, 0.0
      %v945 = vmax.f32 %v811, 0.0
      %v946 = vmax.f32 %v816, 0.0
      %v947 = vmax.f32 %v821, 0.0
      %v948 = vmax.f32 %v826, 0.0
      %v949 = vmax.f32 %v831, 0.0
      %v950 = vmax.f32 %v836, 0.0
      %v951 = vmax.f32 %v841, 0.0
      %v952 = vmax.f32 %v846, 0.0
      %v953 = vmax.f32 %v851, 0.0
      %v954 = vmax.f32 %v856, 0.0
      %v955 = vmax.f32 %v861, 0.0
      %v956 = vmax.f32 %v866, 0.0
      %v957 = vmax.f32 %v871, 0.0
      %v958 = vmax.f32 %v876, 0.0
      %v959 = vmax.f32 %v881, 0.0
      %v960 = vmax.f32 %v886, 0.0
      %v961 = vmax.f32 %v891, 0.0
      %v962 = vmax.f32 %v896, 0.0
      %v963 = vpack.c.bf16 %v900, %v899
      %v964 = vpack.c.bf16 %v902, %v901
      %v965 = vpack.c.bf16 %v904, %v903
      %v966 = vpack.c.bf16 %v906, %v905
      %v967 = vpack.c.bf16 %v908, %v907
      %v968 = vpack.c.bf16 %v910, %v909
      %v969 = vpack.c.bf16 %v912, %v911
      %v970 = vpack.c.bf16 %v914, %v913
      %v971 = vpack.c.bf16 %v916, %v915
      %v972 = vpack.c.bf16 %v918, %v917
      %v973 = vpack.c.bf16 %v920, %v919
      %v974 = vpack.c.bf16 %v922, %v921
      %v975 = vpack.c.bf16 %v924, %v923
      %v976 = vpack.c.bf16 %v926, %v925
      %v977 = vpack.c.bf16 %v928, %v927
      %v978 = vpack.c.bf16 %v930, %v929
      %v979 = vpack.c.bf16 %v932, %v931
      %v980 = vpack.c.bf16 %v934, %v933
      %v981 = vpack.c.bf16 %v936, %v935
      %v982 = vpack.c.bf16 %v938, %v937
      %v983 = vpack.c.bf16 %v940, %v939
      %v984 = vpack.c.bf16 %v942, %v941
      %v985 = vpack.c.bf16 %v944, %v943
      %v986 = vpack.c.bf16 %v946, %v945
      %v987 = vpack.c.bf16 %v948, %v947
      %v988 = vpack.c.bf16 %v950, %v949
      %v989 = vpack.c.bf16 %v952, %v951
      %v990 = vpack.c.bf16 %v954, %v953
      %v991 = vpack.c.bf16 %v956, %v955
      %v992 = vpack.c.bf16 %v958, %v957
      %v993 = vpack.c.bf16 %v960, %v959
      %v994 = vpack.c.bf16 %v962, %v961
      %v995 = vld [vmem:[%s2] sm:$0xf]
      %v996 = vld [vmem:[%s2 + $0x4] sm:$0xf]
      %v997 = vld [vmem:[%s2 + $0x8] sm:$0xf]
      %v998 = vld [vmem:[%s2 + $0xc] sm:$0xf]
      %v999 = vld [vmem:[%s2 + $0x10] sm:$0xf]
      %v1000 = vld [vmem:[%s2 + $0x14] sm:$0xf]
      %v1001 = vld [vmem:[%s2 + $0x18] sm:$0xf]
      %v1002 = vld [vmem:[%s2 + $0x1c] sm:$0xf]
      %v1003 = vld [vmem:[%s2 + $0x20] sm:$0xf]
      %v1004 = vld [vmem:[%s2 + $0x24] sm:$0xf]
      %v1005 = vld [vmem:[%s2 + $0x28] sm:$0xf]
      %v1006 = vld [vmem:[%s2 + $0x2c] sm:$0xf]
      %v1007 = vld [vmem:[%s2 + $0x30] sm:$0xf]
      %v1008 = vld [vmem:[%s2 + $0x34] sm:$0xf]
      %v1009 = vld [vmem:[%s2 + $0x38] sm:$0xf]
      %v1010 = vld [vmem:[%s2 + $0x3c] sm:$0xf]
      %v1011 = vld [vmem:[%s3] sm:$0x1]
      %v1012 = vlaneseq
      %v1013 = vshrl.u32 %v1012, 7
      %v1014 = vsub.s32 0, %v1013
      %v1015 = vrot.slane %v1011, %v1014
      %v1032 = vunpack.c.l.b16 %v995
      %v1033 = vunpack.c.l.b16 %v996
      %v1034 = vunpack.c.l.b16 %v997
      %v1035 = vunpack.c.l.b16 %v998
      %v1036 = vunpack.c.l.b16 %v999
      %v1037 = vunpack.c.l.b16 %v1000
      %v1038 = vunpack.c.l.b16 %v1001
      %v1039 = vunpack.c.l.b16 %v1002
      %v1040 = vunpack.c.l.b16 %v1003
      %v1041 = vunpack.c.l.b16 %v1004
      %v1042 = vunpack.c.l.b16 %v1005
      %v1043 = vunpack.c.l.b16 %v1006
      %v1044 = vunpack.c.l.b16 %v1007
      %v1045 = vunpack.c.l.b16 %v1008
      %v1046 = vunpack.c.l.b16 %v1009
      %v1047 = vunpack.c.l.b16 %v1010
      %v1048 = vpack.c.b16 %v1033, %v1032
      %v1049 = vpack.c.b16 %v1035, %v1034
      %v1050 = vpack.c.b16 %v1037, %v1036
      %v1051 = vpack.c.b16 %v1039, %v1038
      %v1052 = vpack.c.b16 %v1041, %v1040
      %v1053 = vpack.c.b16 %v1043, %v1042
      %v1054 = vpack.c.b16 %v1045, %v1044
      %v1055 = vpack.c.b16 %v1047, %v1046
      %1064 = vmatprep.subr.bf16.mxu0 0
      %1065 = vmatpush1.bf16.msra.mxu0 %v1048
      %1066 = vmatprep.subr.bf16.mxu0 0
      %1067 = vmatpush1.bf16.msra.mxu0 %v1049
      %1068 = vmatprep.subr.bf16.mxu0 0
      %1069 = vmatpush1.bf16.msra.mxu0 %v1050
      %1070 = vmatprep.subr.bf16.mxu0 0
      %1071 = vmatpush1.bf16.msra.mxu0 %v1051
      %1072 = vmatprep.subr.bf16.mxu0 0
      %1073 = vmatpush1.bf16.msra.mxu0 %v1052
      %1074 = vmatprep.subr.bf16.mxu0 0
      %1075 = vmatpush1.bf16.msra.mxu0 %v1053
      %1076 = vmatprep.subr.bf16.mxu0 0
      %1077 = vmatpush1.bf16.msra.mxu0 %v1054
      %1078 = vmatprep.subr.bf16.mxu0 0
      %1079 = vmatpush1.bf16.msra.mxu0 %v1055
      %1080 = vmatprep.subr.bf16.mxu0 0
      %1081 = vmatpush1.bf16.msra.mxu0 0
      %1082 = vmatprep.subr.bf16.mxu0 0
      %1083 = vmatpush1.bf16.msra.mxu0 0
      %1084 = vmatprep.subr.bf16.mxu0 0
      %1085 = vmatpush1.bf16.msra.mxu0 0
      %1086 = vmatprep.subr.bf16.mxu0 0
      %1087 = vmatpush1.bf16.msra.mxu0 0
      %1088 = vmatprep.subr.bf16.mxu0 0
      %1089 = vmatpush1.bf16.msra.mxu0 0
      %1090 = vmatprep.subr.bf16.mxu0 0
      %1091 = vmatpush1.bf16.msra.mxu0 0
      %1092 = vmatprep.subr.bf16.mxu0 0
      %1093 = vmatpush1.bf16.msra.mxu0 0
      %1094 = vmatprep.subr.bf16.mxu0 0
      %1095 = vmatpush1.bf16.msra.mxu0 0
      %1096 = vmatprep.mubr.bf16.mxu0 0
      %1097 = vmatmul.mubr.bf16.gmra.mrb[0].mxu0 %v963
      %v1098 = vpop.f32.mrb[0].mxu0
      %v1099 = vadd.f32 %v1015, %v1098
      %v1100 = vpop.f32.mrb[0].mxu0
      %v1101 = vpop.f32.mrb[0].mxu0
      %v1102 = vadd.f32 %v1015, %v1101
      %v1103 = vpop.f32.mrb[0].mxu0
      %1104 = vmatprep.mubr.bf16.mxu0 0
      %1105 = vmatmul.mubr.bf16.gmra.mrb[0].mxu0 %v964
      %v1106 = vpop.f32.mrb[0].mxu0
      %v1107 = vadd.f32 %v1015, %v1106
      %v1108 = vpop.f32.mrb[0].mxu0
      %v1109 = vpop.f32.mrb[0].mxu0
      %v1110 = vadd.f32 %v1015, %v1109
      %v1111 = vpop.f32.mrb[0].mxu0
      %1112 = vmatprep.mubr.bf16.mxu0 0
      %1113 = vmatmul.mubr.bf16.gmra.mrb[0].mxu0 %v965
      %v1114 = vpop.f32.mrb[0].mxu0
      %v1115 = vadd.f32 %v1015, %v1114
      %v1116 = vpop.f32.mrb[0].mxu0
      %v1117 = vpop.f32.mrb[0].mxu0
      %v1118 = vadd.f32 %v1015, %v1117
      %v1119 = vpop.f32.mrb[0].mxu0
      %1120 = vmatprep.mubr.bf16.mxu0 0
      %1121 = vmatmul.mubr.bf16.gmra.mrb[0].mxu0 %v966
      %v1122 = vpop.f32.mrb[0].mxu0
      %v1123 = vadd.f32 %v1015, %v1122
      %v1124 = vpop.f32.mrb[0].mxu0
      %v1125 = vpop.f32.mrb[0].mxu0
      %v1126 = vadd.f32 %v1015, %v1125
      %v1127 = vpop.f32.mrb[0].mxu0
      %1128 = vmatprep.mubr.bf16.mxu0 0
      %1129 = vmatmul.mubr.bf16.gmra.mrb[0].mxu0 %v967
      %v1130 = vpop.f32.mrb[0].mxu0
      %v1131 = vadd.f32 %v1015, %v1130
      %v1132 = vpop.f32.mrb[0].mxu0
      %v1133 = vpop.f32.mrb[0].mxu0
      %v1134 = vadd.f32 %v1015, %v1133
      %v1135 = vpop.f32.mrb[0].mxu0
      %1136 = vmatprep.mubr.bf16.mxu0 0
      %1137 = vmatmul.mubr.bf16.gmra.mrb[0].mxu0 %v968
      %v1138 = vpop.f32.mrb[0].mxu0
      %v1139 = vadd.f32 %v1015, %v1138
      %v1140 = vpop.f32.mrb[0].mxu0
      %v1141 = vpop.f32.mrb[0].mxu0
      %v1142 = vadd.f32 %v1015, %v1141
      %v1143 = vpop.f32.mrb[0].mxu0
      %1144 = vmatprep.mubr.bf16.mxu0 0
      %1145 = vmatmul.mubr.bf16.gmra.mrb[0].mxu0 %v969
      %v1146 = vpop.f32.mrb[0].mxu0
      %v1147 = vadd.f32 %v1015, %v1146
      %v1148 = vpop.f32.mrb[0].mxu0
      %v1149 = vpop.f32.mrb[0].mxu0
      %v1150 = vadd.f32 %v1015, %v1149
      %v1151 = vpop.f32.mrb[0].mxu0
      %1152 = vmatprep.mubr.bf16.mxu0 0
      %1153 = vmatmul.mubr.bf16.gmra.mrb[0].mxu0 %v970
      %v1154 = vpop.f32.mrb[0].mxu0
      %v1155 = vadd.f32 %v1015, %v1154
      %v1156 = vpop.f32.mrb[0].mxu0
      %v1157 = vpop.f32.mrb[0].mxu0
      %v1158 = vadd.f32 %v1015, %v1157
      %v1159 = vpop.f32.mrb[0].mxu0
      %1160 = vmatprep.mubr.bf16.mxu0 0
      %1161 = vmatmul.mubr.bf16.gmra.mrb[0].mxu0 %v971
      %v1162 = vpop.f32.mrb[0].mxu0
      %v1163 = vadd.f32 %v1015, %v1162
      %v1164 = vpop.f32.mrb[0].mxu0
      %v1165 = vpop.f32.mrb[0].mxu0
      %v1166 = vadd.f32 %v1015, %v1165
      %v1167 = vpop.f32.mrb[0].mxu0
      %1168 = vmatprep.mubr.bf16.mxu0 0
      %1169 = vmatmul.mubr.bf16.gmra.mrb[0].mxu0 %v972
      %v1170 = vpop.f32.mrb[0].mxu0
      %v1171 = vadd.f32 %v1015, %v1170
      %v1172 = vpop.f32.mrb[0].mxu0
      %v1173 = vpop.f32.mrb[0].mxu0
      %v1174 = vadd.f32 %v1015, %v1173
      %v1175 = vpop.f32.mrb[0].mxu0
      %1176 = vmatprep.mubr.bf16.mxu0 0
      %1177 = vmatmul.mubr.bf16.gmra.mrb[0].mxu0 %v973
      %v1178 = vpop.f32.mrb[0].mxu0
      %v1179 = vadd.f32 %v1015, %v1178
      %v1180 = vpop.f32.mrb[0].mxu0
      %v1181 = vpop.f32.mrb[0].mxu0
      %v1182 = vadd.f32 %v1015, %v1181
      %v1183 = vpop.f32.mrb[0].mxu0
      %1184 = vmatprep.mubr.bf16.mxu0 0
      %1185 = vmatmul.mubr.bf16.gmra.mrb[0].mxu0 %v974
      %v1186 = vpop.f32.mrb[0].mxu0
      %v1187 = vadd.f32 %v1015, %v1186
      %v1188 = vpop.f32.mrb[0].mxu0
      %v1189 = vpop.f32.mrb[0].mxu0
      %v1190 = vadd.f32 %v1015, %v1189
      %v1191 = vpop.f32.mrb[0].mxu0
      %1192 = vmatprep.mubr.bf16.mxu0 0
      %1193 = vmatmul.mubr.bf16.gmra.mrb[0].mxu0 %v975
      %v1194 = vpop.f32.mrb[0].mxu0
      %v1195 = vadd.f32 %v1015, %v1194
      %v1196 = vpop.f32.mrb[0].mxu0
      %v1197 = vpop.f32.mrb[0].mxu0
      %v1198 = vadd.f32 %v1015, %v1197
      %v1199 = vpop.f32.mrb[0].mxu0
      %1200 = vmatprep.mubr.bf16.mxu0 0
      %1201 = vmatmul.mubr.bf16.gmra.mrb[0].mxu0 %v976
      %v1202 = vpop.f32.mrb[0].mxu0
      %v1203 = vadd.f32 %v1015, %v1202
      %v1204 = vpop.f32.mrb[0].mxu0
      %v1205 = vpop.f32.mrb[0].mxu0
      %v1206 = vadd.f32 %v1015, %v1205
      %v1207 = vpop.f32.mrb[0].mxu0
      %1208 = vmatprep.mubr.bf16.mxu0 0
      %1209 = vmatmul.mubr.bf16.gmra.mrb[0].mxu0 %v977
      %v1210 = vpop.f32.mrb[0].mxu0
      %v1211 = vadd.f32 %v1015, %v1210
      %v1212 = vpop.f32.mrb[0].mxu0
      %v1213 = vpop.f32.mrb[0].mxu0
      %v1214 = vadd.f32 %v1015, %v1213
      %v1215 = vpop.f32.mrb[0].mxu0
      %1216 = vmatprep.mubr.bf16.mxu0 0
      %1217 = vmatmul.mubr.bf16.gmra.mrb[0].mxu0 %v978
      %v1218 = vpop.f32.mrb[0].mxu0
      %v1219 = vadd.f32 %v1015, %v1218
      %v1220 = vpop.f32.mrb[0].mxu0
      %v1221 = vpop.f32.mrb[0].mxu0
      %v1222 = vadd.f32 %v1015, %v1221
      %v1223 = vpop.f32.mrb[0].mxu0
      %1224 = vmatprep.mubr.bf16.mxu0 0
      %1225 = vmatmul.mubr.bf16.gmra.mrb[0].mxu0 %v979
      %v1226 = vpop.f32.mrb[0].mxu0
      %v1227 = vadd.f32 %v1015, %v1226
      %v1228 = vpop.f32.mrb[0].mxu0
      %v1229 = vpop.f32.mrb[0].mxu0
      %v1230 = vadd.f32 %v1015, %v1229
      %v1231 = vpop.f32.mrb[0].mxu0
      %1232 = vmatprep.mubr.bf16.mxu0 0
      %1233 = vmatmul.mubr.bf16.gmra.mrb[0].mxu0 %v980
      %v1234 = vpop.f32.mrb[0].mxu0
      %v1235 = vadd.f32 %v1015, %v1234
      %v1236 = vpop.f32.mrb[0].mxu0
      %v1237 = vpop.f32.mrb[0].mxu0
      %v1238 = vadd.f32 %v1015, %v1237
      %v1239 = vpop.f32.mrb[0].mxu0
      %1240 = vmatprep.mubr.bf16.mxu0 0
      %1241 = vmatmul.mubr.bf16.gmra.mrb[0].mxu0 %v981
      %v1242 = vpop.f32.mrb[0].mxu0
      %v1243 = vadd.f32 %v1015, %v1242
      %v1244 = vpop.f32.mrb[0].mxu0
      %v1245 = vpop.f32.mrb[0].mxu0
      %v1246 = vadd.f32 %v1015, %v1245
      %v1247 = vpop.f32.mrb[0].mxu0
      %1248 = vmatprep.mubr.bf16.mxu0 0
      %1249 = vmatmul.mubr.bf16.gmra.mrb[0].mxu0 %v982
      %v1250 = vpop.f32.mrb[0].mxu0
      %v1251 = vadd.f32 %v1015, %v1250
      %v1252 = vpop.f32.mrb[0].mxu0
      %v1253 = vpop.f32.mrb[0].mxu0
      %v1254 = vadd.f32 %v1015, %v1253
      %v1255 = vpop.f32.mrb[0].mxu0
      %1256 = vmatprep.mubr.bf16.mxu0 0
      %1257 = vmatmul.mubr.bf16.gmra.mrb[0].mxu0 %v983
      %v1258 = vpop.f32.mrb[0].mxu0
      %v1259 = vadd.f32 %v1015, %v1258
      %v1260 = vpop.f32.mrb[0].mxu0
      %v1261 = vpop.f32.mrb[0].mxu0
      %v1262 = vadd.f32 %v1015, %v1261
      %v1263 = vpop.f32.mrb[0].mxu0
      %1264 = vmatprep.mubr.bf16.mxu0 0
      %1265 = vmatmul.mubr.bf16.gmra.mrb[0].mxu0 %v984
      %v1266 = vpop.f32.mrb[0].mxu0
      %v1267 = vadd.f32 %v1015, %v1266
      %v1268 = vpop.f32.mrb[0].mxu0
      %v1269 = vpop.f32.mrb[0].mxu0
      %v1270 = vadd.f32 %v1015, %v1269
      %v1271 = vpop.f32.mrb[0].mxu0
      %1272 = vmatprep.mubr.bf16.mxu0 0
      %1273 = vmatmul.mubr.bf16.gmra.mrb[0].mxu0 %v985
      %v1274 = vpop.f32.mrb[0].mxu0
      %v1275 = vadd.f32 %v1015, %v1274
      %v1276 = vpop.f32.mrb[0].mxu0
      %v1277 = vpop.f32.mrb[0].mxu0
      %v1278 = vadd.f32 %v1015, %v1277
      %v1279 = vpop.f32.mrb[0].mxu0
      %1280 = vmatprep.mubr.bf16.mxu0 0
      %1281 = vmatmul.mubr.bf16.gmra.mrb[0].mxu0 %v986
      %v1282 = vpop.f32.mrb[0].mxu0
      %v1283 = vadd.f32 %v1015, %v1282
      %v1284 = vpop.f32.mrb[0].mxu0
      %v1285 = vpop.f32.mrb[0].mxu0
      %v1286 = vadd.f32 %v1015, %v1285
      %v1287 = vpop.f32.mrb[0].mxu0
      %1288 = vmatprep.mubr.bf16.mxu0 0
      %1289 = vmatmul.mubr.bf16.gmra.mrb[0].mxu0 %v987
      %v1290 = vpop.f32.mrb[0].mxu0
      %v1291 = vadd.f32 %v1015, %v1290
      %v1292 = vpop.f32.mrb[0].mxu0
      %v1293 = vpop.f32.mrb[0].mxu0
      %v1294 = vadd.f32 %v1015, %v1293
      %v1295 = vpop.f32.mrb[0].mxu0
      %1296 = vmatprep.mubr.bf16.mxu0 0
      %1297 = vmatmul.mubr.bf16.gmra.mrb[0].mxu0 %v988
      %v1298 = vpop.f32.mrb[0].mxu0
      %v1299 = vadd.f32 %v1015, %v1298
      %v1300 = vpop.f32.mrb[0].mxu0
      %v1301 = vpop.f32.mrb[0].mxu0
      %v1302 = vadd.f32 %v1015, %v1301
      %v1303 = vpop.f32.mrb[0].mxu0
      %1304 = vmatprep.mubr.bf16.mxu0 0
      %1305 = vmatmul.mubr.bf16.gmra.mrb[0].mxu0 %v989
      %v1306 = vpop.f32.mrb[0].mxu0
      %v1307 = vadd.f32 %v1015, %v1306
      %v1308 = vpop.f32.mrb[0].mxu0
      %v1309 = vpop.f32.mrb[0].mxu0
      %v1310 = vadd.f32 %v1015, %v1309
      %v1311 = vpop.f32.mrb[0].mxu0
      %1312 = vmatprep.mubr.bf16.mxu0 0
      %1313 = vmatmul.mubr.bf16.gmra.mrb[0].mxu0 %v990
      %v1314 = vpop.f32.mrb[0].mxu0
      %v1315 = vadd.f32 %v1015, %v1314
      %v1316 = vpop.f32.mrb[0].mxu0
      %v1317 = vpop.f32.mrb[0].mxu0
      %v1318 = vadd.f32 %v1015, %v1317
      %v1319 = vpop.f32.mrb[0].mxu0
      %1320 = vmatprep.mubr.bf16.mxu0 0
      %1321 = vmatmul.mubr.bf16.gmra.mrb[0].mxu0 %v991
      %v1322 = vpop.f32.mrb[0].mxu0
      %v1323 = vadd.f32 %v1015, %v1322
      %v1324 = vpop.f32.mrb[0].mxu0
      %v1325 = vpop.f32.mrb[0].mxu0
      %v1326 = vadd.f32 %v1015, %v1325
      %v1327 = vpop.f32.mrb[0].mxu0
      %1328 = vmatprep.mubr.bf16.mxu0 0
      %1329 = vmatmul.mubr.bf16.gmra.mrb[0].mxu0 %v992
      %v1330 = vpop.f32.mrb[0].mxu0
      %v1331 = vadd.f32 %v1015, %v1330
      %v1332 = vpop.f32.mrb[0].mxu0
      %v1333 = vpop.f32.mrb[0].mxu0
      %v1334 = vadd.f32 %v1015, %v1333
      %v1335 = vpop.f32.mrb[0].mxu0
      %1336 = vmatprep.mubr.bf16.mxu0 0
      %1337 = vmatmul.mubr.bf16.gmra.mrb[0].mxu0 %v993
      %v1338 = vpop.f32.mrb[0].mxu0
      %v1339 = vadd.f32 %v1015, %v1338
      %v1340 = vpop.f32.mrb[0].mxu0
      %v1341 = vpop.f32.mrb[0].mxu0
      %v1342 = vadd.f32 %v1015, %v1341
      %v1343 = vpop.f32.mrb[0].mxu0
      %1344 = vmatprep.mubr.bf16.mxu0 0
      %1345 = vmatmul.mubr.bf16.gmra.mrb[0].mxu0 %v994
      %v1346 = vpop.f32.mrb[0].mxu0
      %v1347 = vadd.f32 %v1015, %v1346
      %v1348 = vpop.f32.mrb[0].mxu0
      %v1349 = vpop.f32.mrb[0].mxu0
      %v1350 = vadd.f32 %v1015, %v1349
      %v1351 = vpop.f32.mrb[0].mxu0
      %1352 = vdwg.mxu0
      %v1353 = vmax.f32 %v1099, 0.0
      %v1354 = vmax.f32 %v1102, 0.0
      %v1355 = vmax.f32 %v1107, 0.0
      %v1356 = vmax.f32 %v1110, 0.0
      %v1357 = vmax.f32 %v1115, 0.0
      %v1358 = vmax.f32 %v1118, 0.0
      %v1359 = vmax.f32 %v1123, 0.0
      %v1360 = vmax.f32 %v1126, 0.0
      %v1361 = vmax.f32 %v1131, 0.0
      %v1362 = vmax.f32 %v1134, 0.0
      %v1363 = vmax.f32 %v1139, 0.0
      %v1364 = vmax.f32 %v1142, 0.0
      %v1365 = vmax.f32 %v1147, 0.0
      %v1366 = vmax.f32 %v1150, 0.0
      %v1367 = vmax.f32 %v1155, 0.0
      %v1368 = vmax.f32 %v1158, 0.0
      %v1369 = vmax.f32 %v1163, 0.0
      %v1370 = vmax.f32 %v1166, 0.0
      %v1371 = vmax.f32 %v1171, 0.0
      %v1372 = vmax.f32 %v1174, 0.0
      %v1373 = vmax.f32 %v1179, 0.0
      %v1374 = vmax.f32 %v1182, 0.0
      %v1375 = vmax.f32 %v1187, 0.0
      %v1376 = vmax.f32 %v1190, 0.0
      %v1377 = vmax.f32 %v1195, 0.0
      %v1378 = vmax.f32 %v1198, 0.0
      %v1379 = vmax.f32 %v1203, 0.0
      %v1380 = vmax.f32 %v1206, 0.0
      %v1381 = vmax.f32 %v1211, 0.0
      %v1382 = vmax.f32 %v1214, 0.0
      %v1383 = vmax.f32 %v1219, 0.0
      %v1384 = vmax.f32 %v1222, 0.0
      %v1385 = vmax.f32 %v1227, 0.0
      %v1386 = vmax.f32 %v1230, 0.0
      %v1387 = vmax.f32 %v1235, 0.0
      %v1388 = vmax.f32 %v1238, 0.0
      %v1389 = vmax.f32 %v1243, 0.0
      %v1390 = vmax.f32 %v1246, 0.0
      %v1391 = vmax.f32 %v1251, 0.0
      %v1392 = vmax.f32 %v1254, 0.0
      %v1393 = vmax.f32 %v1259, 0.0
      %v1394 = vmax.f32 %v1262, 0.0
      %v1395 = vmax.f32 %v1267, 0.0
      %v1396 = vmax.f32 %v1270, 0.0
      %v1397 = vmax.f32 %v1275, 0.0
      %v1398 = vmax.f32 %v1278, 0.0
      %v1399 = vmax.f32 %v1283, 0.0
      %v1400 = vmax.f32 %v1286, 0.0
      %v1401 = vmax.f32 %v1291, 0.0
      %v1402 = vmax.f32 %v1294, 0.0
      %v1403 = vmax.f32 %v1299, 0.0
      %v1404 = vmax.f32 %v1302, 0.0
      %v1405 = vmax.f32 %v1307, 0.0
      %v1406 = vmax.f32 %v1310, 0.0
      %v1407 = vmax.f32 %v1315, 0.0
      %v1408 = vmax.f32 %v1318, 0.0
      %v1409 = vmax.f32 %v1323, 0.0
      %v1410 = vmax.f32 %v1326, 0.0
      %v1411 = vmax.f32 %v1331, 0.0
      %v1412 = vmax.f32 %v1334, 0.0
      %v1413 = vmax.f32 %v1339, 0.0
      %v1414 = vmax.f32 %v1342, 0.0
      %v1415 = vmax.f32 %v1347, 0.0
      %v1416 = vmax.f32 %v1350, 0.0
      %v1417 = vpack.c.bf16 %v1354, %v1353
      %v1418 = vpack.c.bf16 %v1356, %v1355
      %v1419 = vpack.c.bf16 %v1358, %v1357
      %v1420 = vpack.c.bf16 %v1360, %v1359
      %v1421 = vpack.c.bf16 %v1362, %v1361
      %v1422 = vpack.c.bf16 %v1364, %v1363
      %v1423 = vpack.c.bf16 %v1366, %v1365
      %v1424 = vpack.c.bf16 %v1368, %v1367
      %v1425 = vpack.c.bf16 %v1370, %v1369
      %v1426 = vpack.c.bf16 %v1372, %v1371
      %v1427 = vpack.c.bf16 %v1374, %v1373
      %v1428 = vpack.c.bf16 %v1376, %v1375
      %v1429 = vpack.c.bf16 %v1378, %v1377
      %v1430 = vpack.c.bf16 %v1380, %v1379
      %v1431 = vpack.c.bf16 %v1382, %v1381
      %v1432 = vpack.c.bf16 %v1384, %v1383
      %v1433 = vpack.c.bf16 %v1386, %v1385
      %v1434 = vpack.c.bf16 %v1388, %v1387
      %v1435 = vpack.c.bf16 %v1390, %v1389
      %v1436 = vpack.c.bf16 %v1392, %v1391
      %v1437 = vpack.c.bf16 %v1394, %v1393
      %v1438 = vpack.c.bf16 %v1396, %v1395
      %v1439 = vpack.c.bf16 %v1398, %v1397
      %v1440 = vpack.c.bf16 %v1400, %v1399
      %v1441 = vpack.c.bf16 %v1402, %v1401
      %v1442 = vpack.c.bf16 %v1404, %v1403
      %v1443 = vpack.c.bf16 %v1406, %v1405
      %v1444 = vpack.c.bf16 %v1408, %v1407
      %v1445 = vpack.c.bf16 %v1410, %v1409
      %v1446 = vpack.c.bf16 %v1412, %v1411
      %v1447 = vpack.c.bf16 %v1414, %v1413
      %v1448 = vpack.c.bf16 %v1416, %v1415
      %v1449 = vld [vmem:[%s2 + $0x40] sm:$0xf]
      %v1450 = vld [vmem:[%s2 + $0x44] sm:$0xf]
      %v1451 = vld [vmem:[%s2 + $0x48] sm:$0xf]
      %v1452 = vld [vmem:[%s2 + $0x4c] sm:$0xf]
      %v1453 = vld [vmem:[%s2 + $0x50] sm:$0xf]
      %v1454 = vld [vmem:[%s2 + $0x54] sm:$0xf]
      %v1455 = vld [vmem:[%s2 + $0x58] sm:$0xf]
      %v1456 = vld [vmem:[%s2 + $0x5c] sm:$0xf]
      %v1457 = vld [vmem:[%s2 + $0x60] sm:$0xf]
      %v1458 = vld [vmem:[%s2 + $0x64] sm:$0xf]
      %v1459 = vld [vmem:[%s2 + $0x68] sm:$0xf]
      %v1460 = vld [vmem:[%s2 + $0x6c] sm:$0xf]
      %v1461 = vld [vmem:[%s2 + $0x70] sm:$0xf]
      %v1462 = vld [vmem:[%s2 + $0x74] sm:$0xf]
      %v1463 = vld [vmem:[%s2 + $0x78] sm:$0xf]
      %v1464 = vld [vmem:[%s2 + $0x7c] sm:$0xf]
      %v1465 = vld [vmem:[%s3 + $0x1] sm:$0x1]
      %v1466 = vlaneseq
      %v1467 = vshrl.u32 %v1466, 7
      %v1468 = vsub.s32 0, %v1467
      %v1469 = vrot.slane %v1465, %v1468
      %v1486 = vunpack.c.l.b16 %v1449
      %v1487 = vunpack.c.l.b16 %v1450
      %v1488 = vunpack.c.l.b16 %v1451
      %v1489 = vunpack.c.l.b16 %v1452
      %v1490 = vunpack.c.l.b16 %v1453
      %v1491 = vunpack.c.l.b16 %v1454
      %v1492 = vunpack.c.l.b16 %v1455
      %v1493 = vunpack.c.l.b16 %v1456
      %v1494 = vunpack.c.l.b16 %v1457
      %v1495 = vunpack.c.l.b16 %v1458
      %v1496 = vunpack.c.l.b16 %v1459
      %v1497 = vunpack.c.l.b16 %v1460
      %v1498 = vunpack.c.l.b16 %v1461
      %v1499 = vunpack.c.l.b16 %v1462
      %v1500 = vunpack.c.l.b16 %v1463
      %v1501 = vunpack.c.l.b16 %v1464
      %v1502 = vpack.c.b16 %v1487, %v1486
      %v1503 = vpack.c.b16 %v1489, %v1488
      %v1504 = vpack.c.b16 %v1491, %v1490
      %v1505 = vpack.c.b16 %v1493, %v1492
      %v1506 = vpack.c.b16 %v1495, %v1494
      %v1507 = vpack.c.b16 %v1497, %v1496
      %v1508 = vpack.c.b16 %v1499, %v1498
      %v1509 = vpack.c.b16 %v1501, %v1500
      %1518 = vmatprep.subr.bf16.mxu0 0
      %1519 = vmatpush1.bf16.msra.mxu0 %v1502
      %1520 = vmatprep.subr.bf16.mxu0 0
      %1521 = vmatpush1.bf16.msra.mxu0 %v1503
      %1522 = vmatprep.subr.bf16.mxu0 0
      %1523 = vmatpush1.bf16.msra.mxu0 %v1504
      %1524 = vmatprep.subr.bf16.mxu0 0
      %1525 = vmatpush1.bf16.msra.mxu0 %v1505
      %1526 = vmatprep.subr.bf16.mxu0 0
      %1527 = vmatpush1.bf16.msra.mxu0 %v1506
      %1528 = vmatprep.subr.bf16.mxu0 0
      %1529 = vmatpush1.bf16.msra.mxu0 %v1507
      %1530 = vmatprep.subr.bf16.mxu0 0
      %1531 = vmatpush1.bf16.msra.mxu0 %v1508
      %1532 = vmatprep.subr.bf16.mxu0 0
      %1533 = vmatpush1.bf16.msra.mxu0 %v1509
      %1534 = vmatprep.subr.bf16.mxu0 0
      %1535 = vmatpush1.bf16.msra.mxu0 0
      %1536 = vmatprep.subr.bf16.mxu0 0
      %1537 = vmatpush1.bf16.msra.mxu0 0
      %1538 = vmatprep.subr.bf16.mxu0 0
      %1539 = vmatpush1.bf16.msra.mxu0 0
      %1540 = vmatprep.subr.bf16.mxu0 0
      %1541 = vmatpush1.bf16.msra.mxu0 0
      %1542 = vmatprep.subr.bf16.mxu0 0
      %1543 = vmatpush1.bf16.msra.mxu0 0
      %1544 = vmatprep.subr.bf16.mxu0 0
      %1545 = vmatpush1.bf16.msra.mxu0 0
      %1546 = vmatprep.subr.bf16.mxu0 0
      %1547 = vmatpush1.bf16.msra.mxu0 0
      %1548 = vmatprep.subr.bf16.mxu0 0
      %1549 = vmatpush1.bf16.msra.mxu0 0
      %1550 = vmatprep.mubr.bf16.mxu0 0
      %1551 = vmatmul.mubr.bf16.gmra.mrb[0].mxu0 %v1417
      %v1552 = vpop.f32.mrb[0].mxu0
      %v1553 = vadd.f32 %v1469, %v1552
      %v1554 = vpop.f32.mrb[0].mxu0
      %v1555 = vpop.f32.mrb[0].mxu0
      %v1556 = vadd.f32 %v1469, %v1555
      %v1557 = vpop.f32.mrb[0].mxu0
      %1558 = vmatprep.mubr.bf16.mxu0 0
      %1559 = vmatmul.mubr.bf16.gmra.mrb[0].mxu0 %v1418
      %v1560 = vpop.f32.mrb[0].mxu0
      %v1561 = vadd.f32 %v1469, %v1560
      %v1562 = vpop.f32.mrb[0].mxu0
      %v1563 = vpop.f32.mrb[0].mxu0
      %v1564 = vadd.f32 %v1469, %v1563
      %v1565 = vpop.f32.mrb[0].mxu0
      %1566 = vmatprep.mubr.bf16.mxu0 0
      %1567 = vmatmul.mubr.bf16.gmra.mrb[0].mxu0 %v1419
      %v1568 = vpop.f32.mrb[0].mxu0
      %v1569 = vadd.f32 %v1469, %v1568
      %v1570 = vpop.f32.mrb[0].mxu0
      %v1571 = vpop.f32.mrb[0].mxu0
      %v1572 = vadd.f32 %v1469, %v1571
      %v1573 = vpop.f32.mrb[0].mxu0
      %1574 = vmatprep.mubr.bf16.mxu0 0
      %1575 = vmatmul.mubr.bf16.gmra.mrb[0].mxu0 %v1420
      %v1576 = vpop.f32.mrb[0].mxu0
      %v1577 = vadd.f32 %v1469, %v1576
      %v1578 = vpop.f32.mrb[0].mxu0
      %v1579 = vpop.f32.mrb[0].mxu0
      %v1580 = vadd.f32 %v1469, %v1579
      %v1581 = vpop.f32.mrb[0].mxu0
      %1582 = vmatprep.mubr.bf16.mxu0 0
      %1583 = vmatmul.mubr.bf16.gmra.mrb[0].mxu0 %v1421
      %v1584 = vpop.f32.mrb[0].mxu0
      %v1585 = vadd.f32 %v1469, %v1584
      %v1586 = vpop.f32.mrb[0].mxu0
      %v1587 = vpop.f32.mrb[0].mxu0
      %v1588 = vadd.f32 %v1469, %v1587
      %v1589 = vpop.f32.mrb[0].mxu0
      %1590 = vmatprep.mubr.bf16.mxu0 0
      %1591 = vmatmul.mubr.bf16.gmra.mrb[0].mxu0 %v1422
      %v1592 = vpop.f32.mrb[0].mxu0
      %v1593 = vadd.f32 %v1469, %v1592
      %v1594 = vpop.f32.mrb[0].mxu0
      %v1595 = vpop.f32.mrb[0].mxu0
      %v1596 = vadd.f32 %v1469, %v1595
      %v1597 = vpop.f32.mrb[0].mxu0
      %1598 = vmatprep.mubr.bf16.mxu0 0
      %1599 = vmatmul.mubr.bf16.gmra.mrb[0].mxu0 %v1423
      %v1600 = vpop.f32.mrb[0].mxu0
      %v1601 = vadd.f32 %v1469, %v1600
      %v1602 = vpop.f32.mrb[0].mxu0
      %v1603 = vpop.f32.mrb[0].mxu0
      %v1604 = vadd.f32 %v1469, %v1603
      %v1605 = vpop.f32.mrb[0].mxu0
      %1606 = vmatprep.mubr.bf16.mxu0 0
      %1607 = vmatmul.mubr.bf16.gmra.mrb[0].mxu0 %v1424
      %v1608 = vpop.f32.mrb[0].mxu0
      %v1609 = vadd.f32 %v1469, %v1608
      %v1610 = vpop.f32.mrb[0].mxu0
      %v1611 = vpop.f32.mrb[0].mxu0
      %v1612 = vadd.f32 %v1469, %v1611
      %v1613 = vpop.f32.mrb[0].mxu0
      %1614 = vmatprep.mubr.bf16.mxu0 0
      %1615 = vmatmul.mubr.bf16.gmra.mrb[0].mxu0 %v1425
      %v1616 = vpop.f32.mrb[0].mxu0
      %v1617 = vadd.f32 %v1469, %v1616
      %v1618 = vpop.f32.mrb[0].mxu0
      %v1619 = vpop.f32.mrb[0].mxu0
      %v1620 = vadd.f32 %v1469, %v1619
      %v1621 = vpop.f32.mrb[0].mxu0
      %1622 = vmatprep.mubr.bf16.mxu0 0
      %1623 = vmatmul.mubr.bf16.gmra.mrb[0].mxu0 %v1426
      %v1624 = vpop.f32.mrb[0].mxu0
      %v1625 = vadd.f32 %v1469, %v1624
      %v1626 = vpop.f32.mrb[0].mxu0
      %v1627 = vpop.f32.mrb[0].mxu0
      %v1628 = vadd.f32 %v1469, %v1627
      %v1629 = vpop.f32.mrb[0].mxu0
      %1630 = vmatprep.mubr.bf16.mxu0 0
      %1631 = vmatmul.mubr.bf16.gmra.mrb[0].mxu0 %v1427
      %v1632 = vpop.f32.mrb[0].mxu0
      %v1633 = vadd.f32 %v1469, %v1632
      %v1634 = vpop.f32.mrb[0].mxu0
      %v1635 = vpop.f32.mrb[0].mxu0
      %v1636 = vadd.f32 %v1469, %v1635
      %v1637 = vpop.f32.mrb[0].mxu0
      %1638 = vmatprep.mubr.bf16.mxu0 0
      %1639 = vmatmul.mubr.bf16.gmra.mrb[0].mxu0 %v1428
      %v1640 = vpop.f32.mrb[0].mxu0
      %v1641 = vadd.f32 %v1469, %v1640
      %v1642 = vpop.f32.mrb[0].mxu0
      %v1643 = vpop.f32.mrb[0].mxu0
      %v1644 = vadd.f32 %v1469, %v1643
      %v1645 = vpop.f32.mrb[0].mxu0
      %1646 = vmatprep.mubr.bf16.mxu0 0
      %1647 = vmatmul.mubr.bf16.gmra.mrb[0].mxu0 %v1429
      %v1648 = vpop.f32.mrb[0].mxu0
      %v1649 = vadd.f32 %v1469, %v1648
      %v1650 = vpop.f32.mrb[0].mxu0
      %v1651 = vpop.f32.mrb[0].mxu0
      %v1652 = vadd.f32 %v1469, %v1651
      %v1653 = vpop.f32.mrb[0].mxu0
      %1654 = vmatprep.mubr.bf16.mxu0 0
      %1655 = vmatmul.mubr.bf16.gmra.mrb[0].mxu0 %v1430
      %v1656 = vpop.f32.mrb[0].mxu0
      %v1657 = vadd.f32 %v1469, %v1656
      %v1658 = vpop.f32.mrb[0].mxu0
      %v1659 = vpop.f32.mrb[0].mxu0
      %v1660 = vadd.f32 %v1469, %v1659
      %v1661 = vpop.f32.mrb[0].mxu0
      %1662 = vmatprep.mubr.bf16.mxu0 0
      %1663 = vmatmul.mubr.bf16.gmra.mrb[0].mxu0 %v1431
      %v1664 = vpop.f32.mrb[0].mxu0
      %v1665 = vadd.f32 %v1469, %v1664
      %v1666 = vpop.f32.mrb[0].mxu0
      %v1667 = vpop.f32.mrb[0].mxu0
      %v1668 = vadd.f32 %v1469, %v1667
      %v1669 = vpop.f32.mrb[0].mxu0
      %1670 = vmatprep.mubr.bf16.mxu0 0
      %1671 = vmatmul.mubr.bf16.gmra.mrb[0].mxu0 %v1432
      %v1672 = vpop.f32.mrb[0].mxu0
      %v1673 = vadd.f32 %v1469, %v1672
      %v1674 = vpop.f32.mrb[0].mxu0
      %v1675 = vpop.f32.mrb[0].mxu0
      %v1676 = vadd.f32 %v1469, %v1675
      %v1677 = vpop.f32.mrb[0].mxu0
      %1678 = vmatprep.mubr.bf16.mxu0 0
      %1679 = vmatmul.mubr.bf16.gmra.mrb[0].mxu0 %v1433
      %v1680 = vpop.f32.mrb[0].mxu0
      %v1681 = vadd.f32 %v1469, %v1680
      %v1682 = vpop.f32.mrb[0].mxu0
      %v1683 = vpop.f32.mrb[0].mxu0
      %v1684 = vadd.f32 %v1469, %v1683
      %v1685 = vpop.f32.mrb[0].mxu0
      %1686 = vmatprep.mubr.bf16.mxu0 0
      %1687 = vmatmul.mubr.bf16.gmra.mrb[0].mxu0 %v1434
      %v1688 = vpop.f32.mrb[0].mxu0
      %v1689 = vadd.f32 %v1469, %v1688
      %v1690 = vpop.f32.mrb[0].mxu0
      %v1691 = vpop.f32.mrb[0].mxu0
      %v1692 = vadd.f32 %v1469, %v1691
      %v1693 = vpop.f32.mrb[0].mxu0
      %1694 = vmatprep.mubr.bf16.mxu0 0
      %1695 = vmatmul.mubr.bf16.gmra.mrb[0].mxu0 %v1435
      %v1696 = vpop.f32.mrb[0].mxu0
      %v1697 = vadd.f32 %v1469, %v1696
      %v1698 = vpop.f32.mrb[0].mxu0
      %v1699 = vpop.f32.mrb[0].mxu0
      %v1700 = vadd.f32 %v1469, %v1699
      %v1701 = vpop.f32.mrb[0].mxu0
      %1702 = vmatprep.mubr.bf16.mxu0 0
      %1703 = vmatmul.mubr.bf16.gmra.mrb[0].mxu0 %v1436
      %v1704 = vpop.f32.mrb[0].mxu0
      %v1705 = vadd.f32 %v1469, %v1704
      %v1706 = vpop.f32.mrb[0].mxu0
      %v1707 = vpop.f32.mrb[0].mxu0
      %v1708 = vadd.f32 %v1469, %v1707
      %v1709 = vpop.f32.mrb[0].mxu0
      %1710 = vmatprep.mubr.bf16.mxu0 0
      %1711 = vmatmul.mubr.bf16.gmra.mrb[0].mxu0 %v1437
      %v1712 = vpop.f32.mrb[0].mxu0
      %v1713 = vadd.f32 %v1469, %v1712
      %v1714 = vpop.f32.mrb[0].mxu0
      %v1715 = vpop.f32.mrb[0].mxu0
      %v1716 = vadd.f32 %v1469, %v1715
      %v1717 = vpop.f32.mrb[0].mxu0
      %1718 = vmatprep.mubr.bf16.mxu0 0
      %1719 = vmatmul.mubr.bf16.gmra.mrb[0].mxu0 %v1438
      %v1720 = vpop.f32.mrb[0].mxu0
      %v1721 = vadd.f32 %v1469, %v1720
      %v1722 = vpop.f32.mrb[0].mxu0
      %v1723 = vpop.f32.mrb[0].mxu0
      %v1724 = vadd.f32 %v1469, %v1723
      %v1725 = vpop.f32.mrb[0].mxu0
      %1726 = vmatprep.mubr.bf16.mxu0 0
      %1727 = vmatmul.mubr.bf16.gmra.mrb[0].mxu0 %v1439
      %v1728 = vpop.f32.mrb[0].mxu0
      %v1729 = vadd.f32 %v1469, %v1728
      %v1730 = vpop.f32.mrb[0].mxu0
      %v1731 = vpop.f32.mrb[0].mxu0
      %v1732 = vadd.f32 %v1469, %v1731
      %v1733 = vpop.f32.mrb[0].mxu0
      %1734 = vmatprep.mubr.bf16.mxu0 0
      %1735 = vmatmul.mubr.bf16.gmra.mrb[0].mxu0 %v1440
      %v1736 = vpop.f32.mrb[0].mxu0
      %v1737 = vadd.f32 %v1469, %v1736
      %v1738 = vpop.f32.mrb[0].mxu0
      %v1739 = vpop.f32.mrb[0].mxu0
      %v1740 = vadd.f32 %v1469, %v1739
      %v1741 = vpop.f32.mrb[0].mxu0
      %1742 = vmatprep.mubr.bf16.mxu0 0
      %1743 = vmatmul.mubr.bf16.gmra.mrb[0].mxu0 %v1441
      %v1744 = vpop.f32.mrb[0].mxu0
      %v1745 = vadd.f32 %v1469, %v1744
      %v1746 = vpop.f32.mrb[0].mxu0
      %v1747 = vpop.f32.mrb[0].mxu0
      %v1748 = vadd.f32 %v1469, %v1747
      %v1749 = vpop.f32.mrb[0].mxu0
      %1750 = vmatprep.mubr.bf16.mxu0 0
      %1751 = vmatmul.mubr.bf16.gmra.mrb[0].mxu0 %v1442
      %v1752 = vpop.f32.mrb[0].mxu0
      %v1753 = vadd.f32 %v1469, %v1752
      %v1754 = vpop.f32.mrb[0].mxu0
      %v1755 = vpop.f32.mrb[0].mxu0
      %v1756 = vadd.f32 %v1469, %v1755
      %v1757 = vpop.f32.mrb[0].mxu0
      %1758 = vmatprep.mubr.bf16.mxu0 0
      %1759 = vmatmul.mubr.bf16.gmra.mrb[0].mxu0 %v1443
      %v1760 = vpop.f32.mrb[0].mxu0
      %v1761 = vadd.f32 %v1469, %v1760
      %v1762 = vpop.f32.mrb[0].mxu0
      %v1763 = vpop.f32.mrb[0].mxu0
      %v1764 = vadd.f32 %v1469, %v1763
      %v1765 = vpop.f32.mrb[0].mxu0
      %1766 = vmatprep.mubr.bf16.mxu0 0
      %1767 = vmatmul.mubr.bf16.gmra.mrb[0].mxu0 %v1444
      %v1768 = vpop.f32.mrb[0].mxu0
      %v1769 = vadd.f32 %v1469, %v1768
      %v1770 = vpop.f32.mrb[0].mxu0
      %v1771 = vpop.f32.mrb[0].mxu0
      %v1772 = vadd.f32 %v1469, %v1771
      %v1773 = vpop.f32.mrb[0].mxu0
      %1774 = vmatprep.mubr.bf16.mxu0 0
      %1775 = vmatmul.mubr.bf16.gmra.mrb[0].mxu0 %v1445
      %v1776 = vpop.f32.mrb[0].mxu0
      %v1777 = vadd.f32 %v1469, %v1776
      %v1778 = vpop.f32.mrb[0].mxu0
      %v1779 = vpop.f32.mrb[0].mxu0
      %v1780 = vadd.f32 %v1469, %v1779
      %v1781 = vpop.f32.mrb[0].mxu0
      %1782 = vmatprep.mubr.bf16.mxu0 0
      %1783 = vmatmul.mubr.bf16.gmra.mrb[0].mxu0 %v1446
      %v1784 = vpop.f32.mrb[0].mxu0
      %v1785 = vadd.f32 %v1469, %v1784
      %v1786 = vpop.f32.mrb[0].mxu0
      %v1787 = vpop.f32.mrb[0].mxu0
      %v1788 = vadd.f32 %v1469, %v1787
      %v1789 = vpop.f32.mrb[0].mxu0
      %1790 = vmatprep.mubr.bf16.mxu0 0
      %1791 = vmatmul.mubr.bf16.gmra.mrb[0].mxu0 %v1447
      %v1792 = vpop.f32.mrb[0].mxu0
      %v1793 = vadd.f32 %v1469, %v1792
      %v1794 = vpop.f32.mrb[0].mxu0
      %v1795 = vpop.f32.mrb[0].mxu0
      %v1796 = vadd.f32 %v1469, %v1795
      %v1797 = vpop.f32.mrb[0].mxu0
      %1798 = vmatprep.mubr.bf16.mxu0 0
      %1799 = vmatmul.mubr.bf16.gmra.mrb[0].mxu0 %v1448
      %v1800 = vpop.f32.mrb[0].mxu0
      %v1801 = vadd.f32 %v1469, %v1800
      %v1802 = vpop.f32.mrb[0].mxu0
      %v1803 = vpop.f32.mrb[0].mxu0
      %v1804 = vadd.f32 %v1469, %v1803
      %v1805 = vpop.f32.mrb[0].mxu0
      %1806 = vdwg.mxu0
      %v1807 = vmax.f32 %v1553, 0.0
      %v1808 = vmax.f32 %v1556, 0.0
      %v1809 = vmax.f32 %v1561, 0.0
      %v1810 = vmax.f32 %v1564, 0.0
      %v1811 = vmax.f32 %v1569, 0.0
      %v1812 = vmax.f32 %v1572, 0.0
      %v1813 = vmax.f32 %v1577, 0.0
      %v1814 = vmax.f32 %v1580, 0.0
      %v1815 = vmax.f32 %v1585, 0.0
      %v1816 = vmax.f32 %v1588, 0.0
      %v1817 = vmax.f32 %v1593, 0.0
      %v1818 = vmax.f32 %v1596, 0.0
      %v1819 = vmax.f32 %v1601, 0.0
      %v1820 = vmax.f32 %v1604, 0.0
      %v1821 = vmax.f32 %v1609, 0.0
      %v1822 = vmax.f32 %v1612, 0.0
      %v1823 = vmax.f32 %v1617, 0.0
      %v1824 = vmax.f32 %v1620, 0.0
      %v1825 = vmax.f32 %v1625, 0.0
      %v1826 = vmax.f32 %v1628, 0.0
      %v1827 = vmax.f32 %v1633, 0.0
      %v1828 = vmax.f32 %v1636, 0.0
      %v1829 = vmax.f32 %v1641, 0.0
      %v1830 = vmax.f32 %v1644, 0.0
      %v1831 = vmax.f32 %v1649, 0.0
      %v1832 = vmax.f32 %v1652, 0.0
      %v1833 = vmax.f32 %v1657, 0.0
      %v1834 = vmax.f32 %v1660, 0.0
      %v1835 = vmax.f32 %v1665, 0.0
      %v1836 = vmax.f32 %v1668, 0.0
      %v1837 = vmax.f32 %v1673, 0.0
      %v1838 = vmax.f32 %v1676, 0.0
      %v1839 = vmax.f32 %v1681, 0.0
      %v1840 = vmax.f32 %v1684, 0.0
      %v1841 = vmax.f32 %v1689, 0.0
      %v1842 = vmax.f32 %v1692, 0.0
      %v1843 = vmax.f32 %v1697, 0.0
      %v1844 = vmax.f32 %v1700, 0.0
      %v1845 = vmax.f32 %v1705, 0.0
      %v1846 = vmax.f32 %v1708, 0.0
      %v1847 = vmax.f32 %v1713, 0.0
      %v1848 = vmax.f32 %v1716, 0.0
      %v1849 = vmax.f32 %v1721, 0.0
      %v1850 = vmax.f32 %v1724, 0.0
      %v1851 = vmax.f32 %v1729, 0.0
      %v1852 = vmax.f32 %v1732, 0.0
      %v1853 = vmax.f32 %v1737, 0.0
      %v1854 = vmax.f32 %v1740, 0.0
      %v1855 = vmax.f32 %v1745, 0.0
      %v1856 = vmax.f32 %v1748, 0.0
      %v1857 = vmax.f32 %v1753, 0.0
      %v1858 = vmax.f32 %v1756, 0.0
      %v1859 = vmax.f32 %v1761, 0.0
      %v1860 = vmax.f32 %v1764, 0.0
      %v1861 = vmax.f32 %v1769, 0.0
      %v1862 = vmax.f32 %v1772, 0.0
      %v1863 = vmax.f32 %v1777, 0.0
      %v1864 = vmax.f32 %v1780, 0.0
      %v1865 = vmax.f32 %v1785, 0.0
      %v1866 = vmax.f32 %v1788, 0.0
      %v1867 = vmax.f32 %v1793, 0.0
      %v1868 = vmax.f32 %v1796, 0.0
      %v1869 = vmax.f32 %v1801, 0.0
      %v1870 = vmax.f32 %v1804, 0.0
      %v1871 = vld [vmem:[%s4] sm:$0xff]
      %v1872 = vld [vmem:[%s4 + $0x8] sm:$0xff]
      %v1873 = vld [vmem:[%s4 + $0x10] sm:$0xff]
      %v1874 = vld [vmem:[%s4 + $0x18] sm:$0xff]
      %v1875 = vld [vmem:[%s4 + $0x20] sm:$0xff]
      %v1876 = vld [vmem:[%s4 + $0x28] sm:$0xff]
      %v1877 = vld [vmem:[%s4 + $0x30] sm:$0xff]
      %v1878 = vld [vmem:[%s4 + $0x38] sm:$0xff]
      %v1879 = vld [vmem:[%s4 + $0x40] sm:$0xff]
      %v1880 = vld [vmem:[%s4 + $0x48] sm:$0xff]
      %v1881 = vld [vmem:[%s4 + $0x50] sm:$0xff]
      %v1882 = vld [vmem:[%s4 + $0x58] sm:$0xff]
      %v1883 = vld [vmem:[%s4 + $0x60] sm:$0xff]
      %v1884 = vld [vmem:[%s4 + $0x68] sm:$0xff]
      %v1885 = vld [vmem:[%s4 + $0x70] sm:$0xff]
      %v1886 = vld [vmem:[%s4 + $0x78] sm:$0xff]
      %v1887 = vld [vmem:[%s5] sm:$0x1]
      %v1889 = vlaneseq
      %v1890 = vshrl.u32 %v1889, 7
      %v1891 = vsub.s32 0, %v1890
      %v1892 = vrot.slane %v1887, %v1891
      %1894 = vmatprep.subr.mxu0 0.0
      %1895 = vmatpush1.msra.mxu0 %v1871
      %1896 = vmatprep.subr.mxu0 0.0
      %1897 = vmatpush1.msra.mxu0 %v1872
      %1898 = vmatprep.subr.mxu0 0.0
      %1899 = vmatpush1.msra.mxu0 %v1873
      %1900 = vmatprep.subr.mxu0 0.0
      %1901 = vmatpush1.msra.mxu0 %v1874
      %1902 = vmatprep.subr.mxu0 0.0
      %1903 = vmatpush1.msra.mxu0 %v1875
      %1904 = vmatprep.subr.mxu0 0.0
      %1905 = vmatpush1.msra.mxu0 %v1876
      %1906 = vmatprep.subr.mxu0 0.0
      %1907 = vmatpush1.msra.mxu0 %v1877
      %1908 = vmatprep.subr.mxu0 0.0
      %1909 = vmatpush1.msra.mxu0 %v1878
      %1910 = vmatprep.subr.mxu0 0.0
      %1911 = vmatpush1.msra.mxu0 %v1879
      %1912 = vmatprep.subr.mxu0 0.0
      %1913 = vmatpush1.msra.mxu0 %v1880
      %1914 = vmatprep.subr.mxu0 0.0
      %1915 = vmatpush1.msra.mxu0 %v1881
      %1916 = vmatprep.subr.mxu0 0.0
      %1917 = vmatpush1.msra.mxu0 %v1882
      %1918 = vmatprep.subr.mxu0 0.0
      %1919 = vmatpush1.msra.mxu0 %v1883
      %1920 = vmatprep.subr.mxu0 0.0
      %1921 = vmatpush1.msra.mxu0 %v1884
      %1922 = vmatprep.subr.mxu0 0.0
      %1923 = vmatpush1.msra.mxu0 %v1885
      %1924 = vmatprep.subr.mxu0 0.0
      %1925 = vmatpush1.msra.mxu0 %v1886
      %1926 = vmatprep.subr.mxu0 0.0
      %1927 = vmatpush1.msra.mxu0 0.0
      %1928 = vmatprep.subr.mxu0 0.0
      %1929 = vmatpush1.msra.mxu0 0.0
      %1930 = vmatprep.subr.mxu0 0.0
      %1931 = vmatpush1.msra.mxu0 0.0
      %1932 = vmatprep.subr.mxu0 0.0
      %1933 = vmatpush1.msra.mxu0 0.0
      %1934 = vmatprep.subr.mxu0 0.0
      %1935 = vmatpush1.msra.mxu0 0.0
      %1936 = vmatprep.subr.mxu0 0.0
      %1937 = vmatpush1.msra.mxu0 0.0
      %1938 = vmatprep.subr.mxu0 0.0
      %1939 = vmatpush1.msra.mxu0 0.0
      %1940 = vmatprep.subr.mxu0 0.0
      %1941 = vmatpush1.msra.mxu0 0.0
      %1942 = vmatprep.subr.mxu0 0.0
      %1943 = vmatpush1.msra.mxu0 0.0
      %1944 = vmatprep.subr.mxu0 0.0
      %1945 = vmatpush1.msra.mxu0 0.0
      %1946 = vmatprep.subr.mxu0 0.0
      %1947 = vmatpush1.msra.mxu0 0.0
      %1948 = vmatprep.subr.mxu0 0.0
      %1949 = vmatpush1.msra.mxu0 0.0
      %1950 = vmatprep.subr.mxu0 0.0
      %1951 = vmatpush1.msra.mxu0 0.0
      %1952 = vmatprep.subr.mxu0 0.0
      %1953 = vmatpush1.msra.mxu0 0.0
      %1954 = vmatprep.subr.mxu0 0.0
      %1955 = vmatpush1.msra.mxu0 0.0
      %1956 = vmatprep.subr.mxu0 0.0
      %1957 = vmatpush1.msra.mxu0 0.0
      %1958 = vmatprep.mubr.f32.mxu0 0.0
      %1959 = vmatmul.mubr.f32.gmra.mrb[0].mxu0 %v1807
      %v1960 = vpop.f32.mrb[0].mxu0
      %v1961 = vadd.f32 %v1892, %v1960
      %v1962 = vpop.f32.mrb[0].mxu0
      %1963 = vmatprep.mubr.f32.mxu0 0.0
      %1964 = vmatmul.mubr.f32.gmra.mrb[0].mxu0 %v1808
      %v1965 = vpop.f32.mrb[0].mxu0
      %v1966 = vadd.f32 %v1892, %v1965
      %v1967 = vpop.f32.mrb[0].mxu0
      %1968 = vmatprep.mubr.f32.mxu0 0.0
      %1969 = vmatmul.mubr.f32.gmra.mrb[0].mxu0 %v1809
      %v1970 = vpop.f32.mrb[0].mxu0
      %v1971 = vadd.f32 %v1892, %v1970
      %v1972 = vpop.f32.mrb[0].mxu0
      %1973 = vmatprep.mubr.f32.mxu0 0.0
      %1974 = vmatmul.mubr.f32.gmra.mrb[0].mxu0 %v1810
      %v1975 = vpop.f32.mrb[0].mxu0
      %v1976 = vadd.f32 %v1892, %v1975
      %v1977 = vpop.f32.mrb[0].mxu0
      %1978 = vmatprep.mubr.f32.mxu0 0.0
      %1979 = vmatmul.mubr.f32.gmra.mrb[0].mxu0 %v1811
      %v1980 = vpop.f32.mrb[0].mxu0
      %v1981 = vadd.f32 %v1892, %v1980
      %v1982 = vpop.f32.mrb[0].mxu0
      %1983 = vmatprep.mubr.f32.mxu0 0.0
      %1984 = vmatmul.mubr.f32.gmra.mrb[0].mxu0 %v1812
      %v1985 = vpop.f32.mrb[0].mxu0
      %v1986 = vadd.f32 %v1892, %v1985
      %v1987 = vpop.f32.mrb[0].mxu0
      %1988 = vmatprep.mubr.f32.mxu0 0.0
      %1989 = vmatmul.mubr.f32.gmra.mrb[0].mxu0 %v1813
      %v1990 = vpop.f32.mrb[0].mxu0
      %v1991 = vadd.f32 %v1892, %v1990
      %v1992 = vpop.f32.mrb[0].mxu0
      %1993 = vmatprep.mubr.f32.mxu0 0.0
      %1994 = vmatmul.mubr.f32.gmra.mrb[0].mxu0 %v1814
      %v1995 = vpop.f32.mrb[0].mxu0
      %v1996 = vadd.f32 %v1892, %v1995
      %v1997 = vpop.f32.mrb[0].mxu0
      %1998 = vmatprep.mubr.f32.mxu0 0.0
      %1999 = vmatmul.mubr.f32.gmra.mrb[0].mxu0 %v1815
      %v2000 = vpop.f32.mrb[0].mxu0
      %v2001 = vadd.f32 %v1892, %v2000
      %v2002 = vpop.f32.mrb[0].mxu0
      %2003 = vmatprep.mubr.f32.mxu0 0.0
      %2004 = vmatmul.mubr.f32.gmra.mrb[0].mxu0 %v1816
      %v2005 = vpop.f32.mrb[0].mxu0
      %v2006 = vadd.f32 %v1892, %v2005
      %v2007 = vpop.f32.mrb[0].mxu0
      %2008 = vmatprep.mubr.f32.mxu0 0.0
      %2009 = vmatmul.mubr.f32.gmra.mrb[0].mxu0 %v1817
      %v2010 = vpop.f32.mrb[0].mxu0
      %v2011 = vadd.f32 %v1892, %v2010
      %v2012 = vpop.f32.mrb[0].mxu0
      %2013 = vmatprep.mubr.f32.mxu0 0.0
      %2014 = vmatmul.mubr.f32.gmra.mrb[0].mxu0 %v1818
      %v2015 = vpop.f32.mrb[0].mxu0
      %v2016 = vadd.f32 %v1892, %v2015
      %v2017 = vpop.f32.mrb[0].mxu0
      %2018 = vmatprep.mubr.f32.mxu0 0.0
      %2019 = vmatmul.mubr.f32.gmra.mrb[0].mxu0 %v1819
      %v2020 = vpop.f32.mrb[0].mxu0
      %v2021 = vadd.f32 %v1892, %v2020
      %v2022 = vpop.f32.mrb[0].mxu0
      %2023 = vmatprep.mubr.f32.mxu0 0.0
      %2024 = vmatmul.mubr.f32.gmra.mrb[0].mxu0 %v1820
      %v2025 = vpop.f32.mrb[0].mxu0
      %v2026 = vadd.f32 %v1892, %v2025
      %v2027 = vpop.f32.mrb[0].mxu0
      %2028 = vmatprep.mubr.f32.mxu0 0.0
      %2029 = vmatmul.mubr.f32.gmra.mrb[0].mxu0 %v1821
      %v2030 = vpop.f32.mrb[0].mxu0
      %v2031 = vadd.f32 %v1892, %v2030
      %v2032 = vpop.f32.mrb[0].mxu0
      %2033 = vmatprep.mubr.f32.mxu0 0.0
      %2034 = vmatmul.mubr.f32.gmra.mrb[0].mxu0 %v1822
      %v2035 = vpop.f32.mrb[0].mxu0
      %v2036 = vadd.f32 %v1892, %v2035
      %v2037 = vpop.f32.mrb[0].mxu0
      %2038 = vmatprep.mubr.f32.mxu0 0.0
      %2039 = vmatmul.mubr.f32.gmra.mrb[0].mxu0 %v1823
      %v2040 = vpop.f32.mrb[0].mxu0
      %v2041 = vadd.f32 %v1892, %v2040
      %v2042 = vpop.f32.mrb[0].mxu0
      %2043 = vmatprep.mubr.f32.mxu0 0.0
      %2044 = vmatmul.mubr.f32.gmra.mrb[0].mxu0 %v1824
      %v2045 = vpop.f32.mrb[0].mxu0
      %v2046 = vadd.f32 %v1892, %v2045
      %v2047 = vpop.f32.mrb[0].mxu0
      %2048 = vmatprep.mubr.f32.mxu0 0.0
      %2049 = vmatmul.mubr.f32.gmra.mrb[0].mxu0 %v1825
      %v2050 = vpop.f32.mrb[0].mxu0
      %v2051 = vadd.f32 %v1892, %v2050
      %v2052 = vpop.f32.mrb[0].mxu0
      %2053 = vmatprep.mubr.f32.mxu0 0.0
      %2054 = vmatmul.mubr.f32.gmra.mrb[0].mxu0 %v1826
      %v2055 = vpop.f32.mrb[0].mxu0
      %v2056 = vadd.f32 %v1892, %v2055
      %v2057 = vpop.f32.mrb[0].mxu0
      %2058 = vmatprep.mubr.f32.mxu0 0.0
      %2059 = vmatmul.mubr.f32.gmra.mrb[0].mxu0 %v1827
      %v2060 = vpop.f32.mrb[0].mxu0
      %v2061 = vadd.f32 %v1892, %v2060
      %v2062 = vpop.f32.mrb[0].mxu0
      %2063 = vmatprep.mubr.f32.mxu0 0.0
      %2064 = vmatmul.mubr.f32.gmra.mrb[0].mxu0 %v1828
      %v2065 = vpop.f32.mrb[0].mxu0
      %v2066 = vadd.f32 %v1892, %v2065
      %v2067 = vpop.f32.mrb[0].mxu0
      %2068 = vmatprep.mubr.f32.mxu0 0.0
      %2069 = vmatmul.mubr.f32.gmra.mrb[0].mxu0 %v1829
      %v2070 = vpop.f32.mrb[0].mxu0
      %v2071 = vadd.f32 %v1892, %v2070
      %v2072 = vpop.f32.mrb[0].mxu0
      %2073 = vmatprep.mubr.f32.mxu0 0.0
      %2074 = vmatmul.mubr.f32.gmra.mrb[0].mxu0 %v1830
      %v2075 = vpop.f32.mrb[0].mxu0
      %v2076 = vadd.f32 %v1892, %v2075
      %v2077 = vpop.f32.mrb[0].mxu0
      %2078 = vmatprep.mubr.f32.mxu0 0.0
      %2079 = vmatmul.mubr.f32.gmra.mrb[0].mxu0 %v1831
      %v2080 = vpop.f32.mrb[0].mxu0
      %v2081 = vadd.f32 %v1892, %v2080
      %v2082 = vpop.f32.mrb[0].mxu0
      %2083 = vmatprep.mubr.f32.mxu0 0.0
      %2084 = vmatmul.mubr.f32.gmra.mrb[0].mxu0 %v1832
      %v2085 = vpop.f32.mrb[0].mxu0
      %v2086 = vadd.f32 %v1892, %v2085
      %v2087 = vpop.f32.mrb[0].mxu0
      %2088 = vmatprep.mubr.f32.mxu0 0.0
      %2089 = vmatmul.mubr.f32.gmra.mrb[0].mxu0 %v1833
      %v2090 = vpop.f32.mrb[0].mxu0
      %v2091 = vadd.f32 %v1892, %v2090
      %v2092 = vpop.f32.mrb[0].mxu0
      %2093 = vmatprep.mubr.f32.mxu0 0.0
      %2094 = vmatmul.mubr.f32.gmra.mrb[0].mxu0 %v1834
      %v2095 = vpop.f32.mrb[0].mxu0
      %v2096 = vadd.f32 %v1892, %v2095
      %v2097 = vpop.f32.mrb[0].mxu0
      %2098 = vmatprep.mubr.f32.mxu0 0.0
      %2099 = vmatmul.mubr.f32.gmra.mrb[0].mxu0 %v1835
      %v2100 = vpop.f32.mrb[0].mxu0
      %v2101 = vadd.f32 %v1892, %v2100
      %v2102 = vpop.f32.mrb[0].mxu0
      %2103 = vmatprep.mubr.f32.mxu0 0.0
      %2104 = vmatmul.mubr.f32.gmra.mrb[0].mxu0 %v1836
      %v2105 = vpop.f32.mrb[0].mxu0
      %v2106 = vadd.f32 %v1892, %v2105
      %v2107 = vpop.f32.mrb[0].mxu0
      %2108 = vmatprep.mubr.f32.mxu0 0.0
      %2109 = vmatmul.mubr.f32.gmra.mrb[0].mxu0 %v1837
      %v2110 = vpop.f32.mrb[0].mxu0
      %v2111 = vadd.f32 %v1892, %v2110
      %v2112 = vpop.f32.mrb[0].mxu0
      %2113 = vmatprep.mubr.f32.mxu0 0.0
      %2114 = vmatmul.mubr.f32.gmra.mrb[0].mxu0 %v1838
      %v2115 = vpop.f32.mrb[0].mxu0
      %v2116 = vadd.f32 %v1892, %v2115
      %v2117 = vpop.f32.mrb[0].mxu0
      %2118 = vmatprep.mubr.f32.mxu0 0.0
      %2119 = vmatmul.mubr.f32.gmra.mrb[0].mxu0 %v1839
      %v2120 = vpop.f32.mrb[0].mxu0
      %v2121 = vadd.f32 %v1892, %v2120
      %v2122 = vpop.f32.mrb[0].mxu0
      %2123 = vmatprep.mubr.f32.mxu0 0.0
      %2124 = vmatmul.mubr.f32.gmra.mrb[0].mxu0 %v1840
      %v2125 = vpop.f32.mrb[0].mxu0
      %v2126 = vadd.f32 %v1892, %v2125
      %v2127 = vpop.f32.mrb[0].mxu0
      %2128 = vmatprep.mubr.f32.mxu0 0.0
      %2129 = vmatmul.mubr.f32.gmra.mrb[0].mxu0 %v1841
      %v2130 = vpop.f32.mrb[0].mxu0
      %v2131 = vadd.f32 %v1892, %v2130
      %v2132 = vpop.f32.mrb[0].mxu0
      %2133 = vmatprep.mubr.f32.mxu0 0.0
      %2134 = vmatmul.mubr.f32.gmra.mrb[0].mxu0 %v1842
      %v2135 = vpop.f32.mrb[0].mxu0
      %v2136 = vadd.f32 %v1892, %v2135
      %v2137 = vpop.f32.mrb[0].mxu0
      %2138 = vmatprep.mubr.f32.mxu0 0.0
      %2139 = vmatmul.mubr.f32.gmra.mrb[0].mxu0 %v1843
      %v2140 = vpop.f32.mrb[0].mxu0
      %v2141 = vadd.f32 %v1892, %v2140
      %v2142 = vpop.f32.mrb[0].mxu0
      %2143 = vmatprep.mubr.f32.mxu0 0.0
      %2144 = vmatmul.mubr.f32.gmra.mrb[0].mxu0 %v1844
      %v2145 = vpop.f32.mrb[0].mxu0
      %v2146 = vadd.f32 %v1892, %v2145
      %v2147 = vpop.f32.mrb[0].mxu0
      %2148 = vmatprep.mubr.f32.mxu0 0.0
      %2149 = vmatmul.mubr.f32.gmra.mrb[0].mxu0 %v1845
      %v2150 = vpop.f32.mrb[0].mxu0
      %v2151 = vadd.f32 %v1892, %v2150
      %v2152 = vpop.f32.mrb[0].mxu0
      %2153 = vmatprep.mubr.f32.mxu0 0.0
      %2154 = vmatmul.mubr.f32.gmra.mrb[0].mxu0 %v1846
      %v2155 = vpop.f32.mrb[0].mxu0
      %v2156 = vadd.f32 %v1892, %v2155
      %v2157 = vpop.f32.mrb[0].mxu0
      %2158 = vmatprep.mubr.f32.mxu0 0.0
      %2159 = vmatmul.mubr.f32.gmra.mrb[0].mxu0 %v1847
      %v2160 = vpop.f32.mrb[0].mxu0
      %v2161 = vadd.f32 %v1892, %v2160
      %v2162 = vpop.f32.mrb[0].mxu0
      %2163 = vmatprep.mubr.f32.mxu0 0.0
      %2164 = vmatmul.mubr.f32.gmra.mrb[0].mxu0 %v1848
      %v2165 = vpop.f32.mrb[0].mxu0
      %v2166 = vadd.f32 %v1892, %v2165
      %v2167 = vpop.f32.mrb[0].mxu0
      %2168 = vmatprep.mubr.f32.mxu0 0.0
      %2169 = vmatmul.mubr.f32.gmra.mrb[0].mxu0 %v1849
      %v2170 = vpop.f32.mrb[0].mxu0
      %v2171 = vadd.f32 %v1892, %v2170
      %v2172 = vpop.f32.mrb[0].mxu0
      %2173 = vmatprep.mubr.f32.mxu0 0.0
      %2174 = vmatmul.mubr.f32.gmra.mrb[0].mxu0 %v1850
      %v2175 = vpop.f32.mrb[0].mxu0
      %v2176 = vadd.f32 %v1892, %v2175
      %v2177 = vpop.f32.mrb[0].mxu0
      %2178 = vmatprep.mubr.f32.mxu0 0.0
      %2179 = vmatmul.mubr.f32.gmra.mrb[0].mxu0 %v1851
      %v2180 = vpop.f32.mrb[0].mxu0
      %v2181 = vadd.f32 %v1892, %v2180
      %v2182 = vpop.f32.mrb[0].mxu0
      %2183 = vmatprep.mubr.f32.mxu0 0.0
      %2184 = vmatmul.mubr.f32.gmra.mrb[0].mxu0 %v1852
      %v2185 = vpop.f32.mrb[0].mxu0
      %v2186 = vadd.f32 %v1892, %v2185
      %v2187 = vpop.f32.mrb[0].mxu0
      %2188 = vmatprep.mubr.f32.mxu0 0.0
      %2189 = vmatmul.mubr.f32.gmra.mrb[0].mxu0 %v1853
      %v2190 = vpop.f32.mrb[0].mxu0
      %v2191 = vadd.f32 %v1892, %v2190
      %v2192 = vpop.f32.mrb[0].mxu0
      %2193 = vmatprep.mubr.f32.mxu0 0.0
      %2194 = vmatmul.mubr.f32.gmra.mrb[0].mxu0 %v1854
      %v2195 = vpop.f32.mrb[0].mxu0
      %v2196 = vadd.f32 %v1892, %v2195
      %v2197 = vpop.f32.mrb[0].mxu0
      %2198 = vmatprep.mubr.f32.mxu0 0.0
      %2199 = vmatmul.mubr.f32.gmra.mrb[0].mxu0 %v1855
      %v2200 = vpop.f32.mrb[0].mxu0
      %v2201 = vadd.f32 %v1892, %v2200
      %v2202 = vpop.f32.mrb[0].mxu0
      %2203 = vmatprep.mubr.f32.mxu0 0.0
      %2204 = vmatmul.mubr.f32.gmra.mrb[0].mxu0 %v1856
      %v2205 = vpop.f32.mrb[0].mxu0
      %v2206 = vadd.f32 %v1892, %v2205
      %v2207 = vpop.f32.mrb[0].mxu0
      %2208 = vmatprep.mubr.f32.mxu0 0.0
      %2209 = vmatmul.mubr.f32.gmra.mrb[0].mxu0 %v1857
      %v2210 = vpop.f32.mrb[0].mxu0
      %v2211 = vadd.f32 %v1892, %v2210
      %v2212 = vpop.f32.mrb[0].mxu0
      %2213 = vmatprep.mubr.f32.mxu0 0.0
      %2214 = vmatmul.mubr.f32.gmra.mrb[0].mxu0 %v1858
      %v2215 = vpop.f32.mrb[0].mxu0
      %v2216 = vadd.f32 %v1892, %v2215
      %v2217 = vpop.f32.mrb[0].mxu0
      %2218 = vmatprep.mubr.f32.mxu0 0.0
      %2219 = vmatmul.mubr.f32.gmra.mrb[0].mxu0 %v1859
      %v2220 = vpop.f32.mrb[0].mxu0
      %v2221 = vadd.f32 %v1892, %v2220
      %v2222 = vpop.f32.mrb[0].mxu0
      %2223 = vmatprep.mubr.f32.mxu0 0.0
      %2224 = vmatmul.mubr.f32.gmra.mrb[0].mxu0 %v1860
      %v2225 = vpop.f32.mrb[0].mxu0
      %v2226 = vadd.f32 %v1892, %v2225
      %v2227 = vpop.f32.mrb[0].mxu0
      %2228 = vmatprep.mubr.f32.mxu0 0.0
      %2229 = vmatmul.mubr.f32.gmra.mrb[0].mxu0 %v1861
      %v2230 = vpop.f32.mrb[0].mxu0
      %v2231 = vadd.f32 %v1892, %v2230
      %v2232 = vpop.f32.mrb[0].mxu0
      %2233 = vmatprep.mubr.f32.mxu0 0.0
      %2234 = vmatmul.mubr.f32.gmra.mrb[0].mxu0 %v1862
      %v2235 = vpop.f32.mrb[0].mxu0
      %v2236 = vadd.f32 %v1892, %v2235
      %v2237 = vpop.f32.mrb[0].mxu0
      %2238 = vmatprep.mubr.f32.mxu0 0.0
      %2239 = vmatmul.mubr.f32.gmra.mrb[0].mxu0 %v1863
      %v2240 = vpop.f32.mrb[0].mxu0
      %v2241 = vadd.f32 %v1892, %v2240
      %v2242 = vpop.f32.mrb[0].mxu0
      %2243 = vmatprep.mubr.f32.mxu0 0.0
      %2244 = vmatmul.mubr.f32.gmra.mrb[0].mxu0 %v1864
      %v2245 = vpop.f32.mrb[0].mxu0
      %v2246 = vadd.f32 %v1892, %v2245
      %v2247 = vpop.f32.mrb[0].mxu0
      %2248 = vmatprep.mubr.f32.mxu0 0.0
      %2249 = vmatmul.mubr.f32.gmra.mrb[0].mxu0 %v1865
      %v2250 = vpop.f32.mrb[0].mxu0
      %v2251 = vadd.f32 %v1892, %v2250
      %v2252 = vpop.f32.mrb[0].mxu0
      %2253 = vmatprep.mubr.f32.mxu0 0.0
      %2254 = vmatmul.mubr.f32.gmra.mrb[0].mxu0 %v1866
      %v2255 = vpop.f32.mrb[0].mxu0
      %v2256 = vadd.f32 %v1892, %v2255
      %v2257 = vpop.f32.mrb[0].mxu0
      %2258 = vmatprep.mubr.f32.mxu0 0.0
      %2259 = vmatmul.mubr.f32.gmra.mrb[0].mxu0 %v1867
      %v2260 = vpop.f32.mrb[0].mxu0
      %v2261 = vadd.f32 %v1892, %v2260
      %v2262 = vpop.f32.mrb[0].mxu0
      %2263 = vmatprep.mubr.f32.mxu0 0.0
      %2264 = vmatmul.mubr.f32.gmra.mrb[0].mxu0 %v1868
      %v2265 = vpop.f32.mrb[0].mxu0
      %v2266 = vadd.f32 %v1892, %v2265
      %v2267 = vpop.f32.mrb[0].mxu0
      %2268 = vmatprep.mubr.f32.mxu0 0.0
      %2269 = vmatmul.mubr.f32.gmra.mrb[0].mxu0 %v1869
      %v2270 = vpop.f32.mrb[0].mxu0
      %v2271 = vadd.f32 %v1892, %v2270
      %v2272 = vpop.f32.mrb[0].mxu0
      %2273 = vmatprep.mubr.f32.mxu0 0.0
      %2274 = vmatmul.mubr.f32.gmra.mrb[0].mxu0 %v1870
      %v2275 = vpop.f32.mrb[0].mxu0
      %v2276 = vadd.f32 %v1892, %v2275
      %v2277 = vpop.f32.mrb[0].mxu0
      %2278 = vdwg.mxu0
      %vm2279 = vcmask 31744
      %2280 = vst.msk [vmem:[%s253] sm:$0xff] %vm2279, %v1961
      %2281 = vst.msk [vmem:[%s253 + $0x8] sm:$0xff] %vm2279, %v1966
      %2282 = vst.msk [vmem:[%s253 + $0x10] sm:$0xff] %vm2279, %v1971
      %2283 = vst.msk [vmem:[%s253 + $0x18] sm:$0xff] %vm2279, %v1976
      %2284 = vst.msk [vmem:[%s253 + $0x20] sm:$0xff] %vm2279, %v1981
      %2285 = vst.msk [vmem:[%s253 + $0x28] sm:$0xff] %vm2279, %v1986
      %2286 = vst.msk [vmem:[%s253 + $0x30] sm:$0xff] %vm2279, %v1991
      %2287 = vst.msk [vmem:[%s253 + $0x38] sm:$0xff] %vm2279, %v1996
      %2288 = vst.msk [vmem:[%s253 + $0x40] sm:$0xff] %vm2279, %v2001
      %2289 = vst.msk [vmem:[%s253 + $0x48] sm:$0xff] %vm2279, %v2006
      %2290 = vst.msk [vmem:[%s253 + $0x50] sm:$0xff] %vm2279, %v2011
      %2291 = vst.msk [vmem:[%s253 + $0x58] sm:$0xff] %vm2279, %v2016
      %2292 = vst.msk [vmem:[%s253 + $0x60] sm:$0xff] %vm2279, %v2021
      %2293 = vst.msk [vmem:[%s253 + $0x68] sm:$0xff] %vm2279, %v2026
      %2294 = vst.msk [vmem:[%s253 + $0x70] sm:$0xff] %vm2279, %v2031
      %2295 = vst.msk [vmem:[%s253 + $0x78] sm:$0xff] %vm2279, %v2036
      %2296 = vst.msk [vmem:[%s253 + $0x80] sm:$0xff] %vm2279, %v2041
      %2297 = vst.msk [vmem:[%s253 + $0x88] sm:$0xff] %vm2279, %v2046
      %2298 = vst.msk [vmem:[%s253 + $0x90] sm:$0xff] %vm2279, %v2051
      %2299 = vst.msk [vmem:[%s253 + $0x98] sm:$0xff] %vm2279, %v2056
      %2300 = vst.msk [vmem:[%s253 + $0xa0] sm:$0xff] %vm2279, %v2061
      %2301 = vst.msk [vmem:[%s253 + $0xa8] sm:$0xff] %vm2279, %v2066
      %2302 = vst.msk [vmem:[%s253 + $0xb0] sm:$0xff] %vm2279, %v2071
      %2303 = vst.msk [vmem:[%s253 + $0xb8] sm:$0xff] %vm2279, %v2076
      %2304 = vst.msk [vmem:[%s253 + $0xc0] sm:$0xff] %vm2279, %v2081
      %2305 = vst.msk [vmem:[%s253 + $0xc8] sm:$0xff] %vm2279, %v2086
      %2306 = vst.msk [vmem:[%s253 + $0xd0] sm:$0xff] %vm2279, %v2091
      %2307 = vst.msk [vmem:[%s253 + $0xd8] sm:$0xff] %vm2279, %v2096
      %2308 = vst.msk [vmem:[%s253 + $0xe0] sm:$0xff] %vm2279, %v2101
      %2309 = vst.msk [vmem:[%s253 + $0xe8] sm:$0xff] %vm2279, %v2106
      %2310 = vst.msk [vmem:[%s253 + $0xf0] sm:$0xff] %vm2279, %v2111
      %2311 = vst.msk [vmem:[%s253 + $0xf8] sm:$0xff] %vm2279, %v2116
      %2312 = vst.msk [vmem:[%s253 + $0x100] sm:$0xff] %vm2279, %v2121
      %2313 = vst.msk [vmem:[%s253 + $0x108] sm:$0xff] %vm2279, %v2126
      %2314 = vst.msk [vmem:[%s253 + $0x110] sm:$0xff] %vm2279, %v2131
      %2315 = vst.msk [vmem:[%s253 + $0x118] sm:$0xff] %vm2279, %v2136
      %2316 = vst.msk [vmem:[%s253 + $0x120] sm:$0xff] %vm2279, %v2141
      %2317 = vst.msk [vmem:[%s253 + $0x128] sm:$0xff] %vm2279, %v2146
      %2318 = vst.msk [vmem:[%s253 + $0x130] sm:$0xff] %vm2279, %v2151
      %2319 = vst.msk [vmem:[%s253 + $0x138] sm:$0xff] %vm2279, %v2156
      %2320 = vst.msk [vmem:[%s253 + $0x140] sm:$0xff] %vm2279, %v2161
      %2321 = vst.msk [vmem:[%s253 + $0x148] sm:$0xff] %vm2279, %v2166
      %2322 = vst.msk [vmem:[%s253 + $0x150] sm:$0xff] %vm2279, %v2171
      %2323 = vst.msk [vmem:[%s253 + $0x158] sm:$0xff] %vm2279, %v2176
      %2324 = vst.msk [vmem:[%s253 + $0x160] sm:$0xff] %vm2279, %v2181
      %2325 = vst.msk [vmem:[%s253 + $0x168] sm:$0xff] %vm2279, %v2186
      %2326 = vst.msk [vmem:[%s253 + $0x170] sm:$0xff] %vm2279, %v2191
      %2327 = vst.msk [vmem:[%s253 + $0x178] sm:$0xff] %vm2279, %v2196
      %2328 = vst.msk [vmem:[%s253 + $0x180] sm:$0xff] %vm2279, %v2201
      %2329 = vst.msk [vmem:[%s253 + $0x188] sm:$0xff] %vm2279, %v2206
      %2330 = vst.msk [vmem:[%s253 + $0x190] sm:$0xff] %vm2279, %v2211
      %2331 = vst.msk [vmem:[%s253 + $0x198] sm:$0xff] %vm2279, %v2216
      %2332 = vst.msk [vmem:[%s253 + $0x1a0] sm:$0xff] %vm2279, %v2221
      %2333 = vst.msk [vmem:[%s253 + $0x1a8] sm:$0xff] %vm2279, %v2226
      %2334 = vst.msk [vmem:[%s253 + $0x1b0] sm:$0xff] %vm2279, %v2231
      %2335 = vst.msk [vmem:[%s253 + $0x1b8] sm:$0xff] %vm2279, %v2236
      %2336 = vst.msk [vmem:[%s253 + $0x1c0] sm:$0xff] %vm2279, %v2241
      %2337 = vst.msk [vmem:[%s253 + $0x1c8] sm:$0xff] %vm2279, %v2246
      %2338 = vst.msk [vmem:[%s253 + $0x1d0] sm:$0xff] %vm2279, %v2251
      %2339 = vst.msk [vmem:[%s253 + $0x1d8] sm:$0xff] %vm2279, %v2256
      %2340 = vst.msk [vmem:[%s253 + $0x1e0] sm:$0xff] %vm2279, %v2261
      %2341 = vst.msk [vmem:[%s253 + $0x1e8] sm:$0xff] %vm2279, %v2266
      %2342 = vst.msk [vmem:[%s253 + $0x1f0] sm:$0xff] %vm2279, %v2271
      %2343 = vst.msk [vmem:[%s253 + $0x1f8] sm:$0xff] %vm2279, %v2276
      %s2344 = smul.u32 64, %s17
      %p2345 = scmp.lt.s32.totalorder %s2344, 255
      %s2346 = scalar_select %p2345, %s2344, 255
      %s2347 = smul.addr %s2346, 8
      %s2348 = scalar_lea.vmem %s6, %s2347
      // Predicated region
      $region45: #{aero_thermal_net_forward.1} parent=43 // pred_check
        %p2349 = pneg %p166
      $region46: #{aero_thermal_net_forward.1} parent=43 // pred_check_branch
        %2351 = sbr.rel (%p2349) target = $region48
      $region47: #{aero_thermal_net_forward.1} parent=43 // pred_region
        %s2352 = smul.u32 64, %s17
      $region48: #{aero_thermal_net_forward.1} parent=43 // pred_fallthru
        _
    $region44: #{aero_thermal_net_forward.1} parent=5 // pred_fallthru
      _
    %p2353 = scmp.le.s32.totalorder 2, %s12
    // Predicated region
    $region49: #{aero_thermal_net_forward.1} parent=5 // pred_check
      %p2354 = pneg %p2353
    $region50: #{aero_thermal_net_forward.1} parent=5 // pred_check_branch
      %2356 = sbr.rel (%p2354) target = $region52
    $region51: #{aero_thermal_net_forward.1} parent=5 // pred_region
      %s2357 = ssub.s32 %s12, 2
      // Predicated region
      $region53: #{aero_thermal_net_forward.1} parent=51 // pred_check
        %p2358 = pneg %p172
      $region54: #{aero_thermal_net_forward.1} parent=51 // pred_check_branch
        %2360 = sbr.rel (%p2358) target = $region56
      $region55: #{aero_thermal_net_forward.1} parent=51 // pred_region
        %s2361 = smul.u32 64, %s18
        %p2362 = scmp.lt.s32.totalorder %s2361, 255
        %s2363 = scalar_select %p2362, %s2361, 255
        %s2364 = smul.addr %s2363, 8
        %s2365 = scalar_lea.vmem %s6, %s2364
      $region56: #{aero_thermal_net_forward.1} parent=51 // pred_fallthru
        _
    $region52: #{aero_thermal_net_forward.1} parent=5 // pred_fallthru
      _
  $region6: #{aero_thermal_net_forward.1} parent=0 // loop_footer
    %s16 = sadd.s32 1, %s12
  $region7: #{aero_thermal_net_forward.1} parent=0 // loop_footer_branch
    %11 = sbr.rel target = $region3
  $region8: #{aero_thermal_net_forward.1} parent=0 // loop_exit
    _

</llo_original>
